<compile_context>
chip_gen: v5e
topology: v5e:2x2
jax: 0.10.0
libtpu: 0.0.40
codegen_flags: <defaults>
</compile_context>

<pallas_src>
import functools
import math

import jax
import jax.numpy as jnp
from jax import lax
from jax.experimental import pallas as pl
from jax.experimental.pallas import tpu as pltpu


def _round_up(x, m):
    return ((x + m - 1) // m) * m


# Image offsets inside the zero-padded, lane-dense slabs.  The bias-carrier
# ones-lane trick requires both _COL_OFF >= 1 (p0 zeroes lane 0 before conv1)
# and the skip band offset >= 1 (row 0 of r0 stays free for the bias).
_ROW_OFF = 2          # image row offset inside each per-element x slab
_COL_OFF = 2          # image column offset inside each WGX channel group
_Y1_ROW_OFF = 1       # conv1 output row offset inside its eval slab
_Y1_COL_OFF = 1       # conv1 output column offset inside each WG1 group


def _genblock_kernel(x_ref, p0_ref, r1_ref, p1_ref, r2_ref, r0_ref, o_ref, *,
                     b_per_step, rows_per_elem, h_out):
    """One grid step = b_per_step batch elements stacked along the row axis.

    x_ref  : (1, B*HA, Cin*WGX)  zero-padded, nearest-x2-upsampled input slab;
                                 each element's image at (row 2, col 2); lane 0
                                 of the image rows holds 1.0 (bias carrier).
    p0_ref : (2, B*HA, Cin*WGX)  [0]=BN0 scale, [1]=BN0 shift, pre-masked.
    r1_ref : (3, Cin*WGX, Cout*WG1)  per-ky banded-Toeplitz weights of conv1.
    p1_ref : (2, M1, Cout*WG1)   [0]=BN1 scale, [1]=BN1 shift (b1 folded in),
                                 pre-masked so the zero ring is conv2's padding.
    r2_ref : (3, Cout*WG1, Cout*W2)  per-ky banded-Toeplitz weights of conv2.
    r0_ref : (Cin*WGX, Cout*W2)  1x1 skip-conv band; row 0 carries (b0 + b2).
    o_ref  : (1, B*H2, Cout*W2)  lane-dense output slab.
    """
    wdt = r1_ref.dtype
    m1 = p1_ref.shape[1]                              # conv1 eval rows (B*HA - 2)
    m2 = (b_per_step - 1) * rows_per_elem + h_out     # conv2 eval rows

    x = x_ref[0]                                      # (B*HA, Cin*WGX)  f32

    # Input BatchNorm (inference) + ReLU.  p0 is pre-masked per position, so the
    # zero-padding ring and the bias-carrier lane cost nothing here (f32 VPU math).
    xa = jnp.maximum(x * p0_ref[0] + p0_ref[1], 0.0)
    xa = xa.astype(wdt)                               # bf16 LHS for the MXU

    # conv1 (3x3 SAME): 3 accumulating MXU dots on static row-shifted views; the
    # kx taps live in the banded-Toeplitz structure of r1 (no in-kernel concat).
    y1 = jnp.dot(xa[0:m1], r1_ref[0], preferred_element_type=jnp.float32)
    y1 += jnp.dot(xa[1:m1 + 1], r1_ref[1], preferred_element_type=jnp.float32)
    y1 += jnp.dot(xa[2:m1 + 2], r1_ref[2], preferred_element_type=jnp.float32)

    # conv1 bias + BatchNorm1 + ReLU + border zeroing, folded into the pre-masked
    # scale/shift; the zeroed ring doubles as conv2's SAME padding.
    y1 = jnp.maximum(y1 * p1_ref[0] + p1_ref[1], 0.0)
    y1 = y1.astype(wdt)

    # conv2 (3x3 SAME) + 1x1 skip conv + (b0 + b2): 3 + 1 accumulating dots.  The
    # constant-ones lane of x injects the combined bias through row 0 of r0.
    out = jnp.dot(y1[0:m2], r2_ref[0], preferred_element_type=jnp.float32)
    out += jnp.dot(y1[1:m2 + 1], r2_ref[1], preferred_element_type=jnp.float32)
    out += jnp.dot(y1[2:m2 + 2], r2_ref[2], preferred_element_type=jnp.float32)
    xs = x[_ROW_OFF:_ROW_OFF + m2].astype(wdt)
    out += jnp.dot(xs, r0_ref[...], preferred_element_type=jnp.float32)

    # Extract each element's real output rows into the compact lane-dense slab.
    for b in range(b_per_step):
        o_ref[0, b * h_out:(b + 1) * h_out, :] = (
            out[b * rows_per_elem:b * rows_per_elem + h_out])


def _conv3_toeplitz(weff, win, wout):
    """(3,3,Ci,Co) correlation weights -> (3, Ci*win, Co*wout) Toeplitz slabs.

    R[ky][ci*win + wi, co*wout + wo] = weff[ky, kx, ci, co]  iff  wi == wo + kx.
    """
    kh, kw, _, _ = weff.shape
    band = (jnp.arange(win)[None, :, None]
            == jnp.arange(wout)[None, None, :] + jnp.arange(kw)[:, None, None])
    band = band.astype(jnp.float32)                               # (kw, win, wout)
    r = jnp.einsum("yxio,xvw->yivow", weff.astype(jnp.float32), band)
    ci, co = weff.shape[2], weff.shape[3]
    return r.reshape(kh, ci * win, co * wout)


def _skip_toeplitz(w0, bias, win, wout, off):
    """1x1-conv weights mapping lane (ci, wo+off) -> (co, wo); row 0 carries bias."""
    ci, co = w0.shape
    assert off >= 1, "row 0 must stay free to carry the bias via the ones lane"
    band = (jnp.arange(win)[:, None] == jnp.arange(wout)[None, :] + off)
    band = band.astype(jnp.float32)                               # (win, wout)
    r = jnp.einsum("io,vw->ivow", w0.astype(jnp.float32), band)
    r = r.reshape(ci * win, co * wout)
    bias_row = jnp.broadcast_to(bias.astype(jnp.float32)[:, None],
                                (co, wout)).reshape(co * wout)
    return r.at[0].set(bias_row)


def _pick_batch_per_step(n, rows_per_elem):
    """Largest divisor B of n keeping >=2 grid steps (megacore) and B*HA <= 256."""
    best = 1
    for b in range(1, n + 1):
        if n % b:
            continue
        if n >= 2 and n // b < 2:
            continue
        if b * rows_per_elem > 256:
            continue
        best = b
    return best


def make_genblock(params, *, batch, height, width,
                  weights_dtype=jnp.bfloat16, batch_per_step=None):
    """Builds all constants ONCE and returns a jitted forward(x_nchw)."""
    Cin, Cout = params["W1"].shape[0], params["W1"].shape[1]
    H2, W2 = 2 * height, 2 * width
    H1p = _round_up(H2 + 2, 8)                  # per-element conv1 eval rows
    HA = H1p + 2                                # per-element slab rows
    WGX = _round_up(W2 + 2 * _COL_OFF, 128 // math.gcd(Cin, 128))
    WG1 = _round_up(W2 + 2 * _Y1_COL_OFF, 128 // math.gcd(Cout, 128))
    CKX, N1, N2 = Cin * WGX, Cout * WG1, Cout * W2
    f32 = jnp.float32

    if batch_per_step is None:
        batch_per_step = _pick_batch_per_step(batch, HA)
    B = batch_per_step
    assert batch % B == 0, (batch, B)
    G = batch // B                              # grid steps
    HS = B * HA                                 # stacked rows per grid step
    M1 = HS - 2                                 # conv1 eval rows per step
    M2 = (B - 1) * HA + H2                      # conv2 eval rows per step
    assert M2 + 2 <= M1
    assert _ROW_OFF >= 1 and _COL_OFF >= 1      # bias-carrier lane safety

    # ---- folded inference BatchNorm ----
    eps = 1e-5
    s0 = params["bn0_gamma"] / jnp.sqrt(params["bn0_var"] + eps)
    t0 = params["bn0_beta"] - params["bn0_mean"] * s0
    s1 = params["bn1_gamma"] / jnp.sqrt(params["bn1_var"] + eps)
    t1 = params["bn1_beta"] - params["bn1_mean"] * s1
    shift1 = params["b1"] * s1 + t1             # conv1 bias folded into BN1 shift

    # ---- pre-masked, per-position BN scale/shift maps (built once) ----
    def masked_maps(grpw, roff, coff, scale_c, shift_c, nchan):
        rm = ((jnp.arange(HA) >= roff) & (jnp.arange(HA) < roff + H2)).astype(f32)
        cm = ((jnp.arange(grpw) >= coff) & (jnp.arange(grpw) < coff + W2)).astype(f32)
        m = rm[:, None, None] * cm[None, None, :]                # (HA, 1, grpw)
        return jnp.stack(
            [(m * scale_c[None, :, None]).reshape(HA, nchan * grpw),
             (m * shift_c[None, :, None]).reshape(HA, nchan * grpw)], axis=0)

    p0 = jnp.tile(masked_maps(WGX, _ROW_OFF, _COL_OFF, s0, t0, Cin),
                  (1, B, 1))                                     # (2, HS, CKX)
    p1 = jnp.tile(masked_maps(WG1, _Y1_ROW_OFF, _Y1_COL_OFF, s1, shift1, Cout),
                  (1, B, 1))[:, :M1, :]                          # (2, M1, N1)

    # ---- ConvTranspose2d(stride=1, pad) == correlation with flipped weights ----
    w1eff = jnp.flip(params["W1"], axis=(2, 3)).transpose(2, 3, 0, 1)  # (3,3,Cin,Cout)
    w2eff = jnp.flip(params["W2"], axis=(2, 3)).transpose(2, 3, 0, 1)  # (3,3,Cout,Cout)
    w0eff = params["W0"][:, :, 0, 0]                                    # (Cin, Cout)
    r1 = _conv3_toeplitz(w1eff, WGX, WG1).astype(weights_dtype)         # (3, CKX, N1)
    r2 = _conv3_toeplitz(w2eff, WG1, W2).astype(weights_dtype)          # (3, N1, N2)
    r0 = _skip_toeplitz(w0eff, params["b0"] + params["b2"], WGX, W2,
                        _COL_OFF).astype(weights_dtype)                 # (CKX, N2)

    kernel = functools.partial(_genblock_kernel, b_per_step=B,
                               rows_per_elem=HA, h_out=H2)
    grid_call = pl.pallas_call(
        kernel,
        out_shape=jax.ShapeDtypeStruct((G, B * H2, N2), f32),
        grid=(G,),
        in_specs=[
            pl.BlockSpec((1, HS, CKX), lambda g: (g, 0, 0)),
            # Constant-index-map operands: fetched once (block index never
            # changes across the grid); only their VMEM allocation is doubled.
            pl.BlockSpec((2, HS, CKX), lambda g: (0, 0, 0)),
            pl.BlockSpec((3, CKX, N1), lambda g: (0, 0, 0)),
            pl.BlockSpec((2, M1, N1), lambda g: (0, 0, 0)),
            pl.BlockSpec((3, N1, N2), lambda g: (0, 0, 0)),
            pl.BlockSpec((CKX, N2), lambda g: (0, 0)),
        ],
        out_specs=pl.BlockSpec((1, B * H2, N2), lambda g: (g, 0, 0)),
        compiler_params=pltpu.CompilerParams(
            dimension_semantics=("parallel",),
            vmem_limit_bytes=32 * 1024 * 1024,
        ),
    )

    def forward(x_nchw):
        # Per-call work is activation plumbing only (upsample + slab packing).
        xu = jnp.repeat(jnp.repeat(x_nchw.astype(f32), 2, axis=2), 2, axis=3)
        xs = jnp.zeros((batch, HA, Cin, WGX), f32)
        xs = xs.at[:, _ROW_OFF:_ROW_OFF + H2, :, _COL_OFF:_COL_OFF + W2].set(
            jnp.transpose(xu, (0, 2, 1, 3)))
        # constant 1.0 bias-carrier lane: zeroed by p0 before conv1; row 0 of r0
        # (never hit by the skip band since _COL_OFF >= 1) injects b0 + b2.
        xs = xs.at[:, _ROW_OFF:_ROW_OFF + H2, 0, 0].set(1.0)
        xs = xs.reshape(batch, HA, CKX).reshape(G, HS, CKX)
        out = grid_call(xs, p0, r1, p1, r2, r0)          # (G, B*H2, N2)
        return out.reshape(batch, H2, Cout, W2).transpose(0, 2, 1, 3)

    return jax.jit(forward)


def genblock_reference(x_nchw, params):
    """Pure-JAX reference following the PyTorch forward order exactly."""
    eps = 1e-5
    x = jnp.transpose(x_nchw, (0, 2, 3, 1)).astype(jnp.float32)
    s0 = params["bn0_gamma"] / jnp.sqrt(params["bn0_var"] + eps)
    t0 = params["bn0_beta"] - params["bn0_mean"] * s0
    s1 = params["bn1_gamma"] / jnp.sqrt(params["bn1_var"] + eps)
    t1 = params["bn1_beta"] - params["bn1_mean"] * s1
    dn = ("NHWC", "HWIO", "NHWC")

    a = jnp.maximum(x * s0 + t0, 0.0)                       # bn + ReLU
    a = jnp.repeat(jnp.repeat(a, 2, axis=1), 2, axis=2)     # nearest x2
    w1 = jnp.flip(params["W1"], axis=(2, 3)).transpose(2, 3, 0, 1)
    y = lax.conv_general_dilated(a, w1, (1, 1), "SAME",
                                 dimension_numbers=dn) + params["b1"]
    y = jnp.maximum(y * s1 + t1, 0.0)                       # conv block 1 bn + ReLU
    w2 = jnp.flip(params["W2"], axis=(2, 3)).transpose(2, 3, 0, 1)
    y = lax.conv_general_dilated(y, w2, (1, 1), "SAME",
                                 dimension_numbers=dn) + params["b2"]

    xu = jnp.repeat(jnp.repeat(x, 2, axis=1), 2, axis=2)    # skip: upsample raw x
    w0 = params["W0"].transpose(2, 3, 0, 1)                 # (1,1,Cin,Cout)
    skip = lax.conv_general_dilated(xu, w0, (1, 1), "SAME",
                                    dimension_numbers=dn) + params["b0"]
    return jnp.transpose(y + skip, (0, 3, 1, 2))


def init_genblock_params(key, in_channels, out_channels):
    ks = jax.random.split(key, 14)
    f32 = jnp.float32
    return {
        # ConvTranspose2d weights: (in_channels, out_channels, kH, kW)
        "W0": 0.2 * jax.random.normal(ks[0], (in_channels, out_channels, 1, 1), f32),
        "b0": 0.1 * jax.random.normal(ks[1], (out_channels,), f32),
        "W1": 0.2 * jax.random.normal(ks[2], (in_channels, out_channels, 3, 3), f32),
        "b1": 0.1 * jax.random.normal(ks[3], (out_channels,), f32),
        "W2": 0.2 * jax.random.normal(ks[4], (out_channels, out_channels, 3, 3), f32),
        "b2": 0.1 * jax.random.normal(ks[5], (out_channels,), f32),
        # BatchNorm2d(in_channels) — inference-mode parameters
        "bn0_gamma": 1.0 + 0.1 * jax.random.normal(ks[6], (in_channels,), f32),
        "bn0_beta": 0.1 * jax.random.normal(ks[7], (in_channels,), f32),
        "bn0_mean": 0.1 * jax.random.normal(ks[8], (in_channels,), f32),
        "bn0_var": 1.0 + 0.1 * jnp.abs(jax.random.normal(ks[9], (in_channels,), f32)),
        # BatchNorm2d(out_channels) inside conv block 1
        "bn1_gamma": 1.0 + 0.1 * jax.random.normal(ks[10], (out_channels,), f32),
        "bn1_beta": 0.1 * jax.random.normal(ks[11], (out_channels,), f32),
        "bn1_mean": 0.1 * jax.random.normal(ks[12], (out_channels,), f32),
        "bn1_var": 1.0 + 0.1 * jnp.abs(jax.random.normal(ks[13], (out_channels,), f32)),
    }


if __name__ == "__main__":
    key = jax.random.PRNGKey(0)
    k_x, k_p, k_x2 = jax.random.split(key, 3)
    N, Cin, Cout, H, W = 2, 4, 8, 16, 16

    x = jax.random.normal(k_x, (N, Cin, H, W), jnp.float32)
    params = init_genblock_params(k_p, Cin, Cout)
    ref = genblock_reference(x, params)

    # 1) f32 constants — tight tolerance catches layout / indexing bugs.
    fwd_f32 = make_genblock(params, batch=N, height=H, width=W,
                            weights_dtype=jnp.float32)
    out32 = jax.block_until_ready(fwd_f32(x))
    assert out32.shape == (N, Cout, 2 * H, 2 * W), out32.shape
    err32 = float(jnp.max(jnp.abs(out32 - ref)))
    assert err32 < 1e-3, f"f32 path max abs error too large: {err32}"

    # 2) bf16 weights / matmul LHS (default, production configuration).
    fwd_bf16 = make_genblock(params, batch=N, height=H, width=W)
    out16 = jax.block_until_ready(fwd_bf16(x))
    err16 = float(jnp.max(jnp.abs(out16 - ref)))
    assert err16 < 5e-2, f"bf16 path max abs error too large: {err16}"

    # 3) M-batched path: N=4 -> 2 grid steps, 2 batch elements stacked per step.
    N4 = 4
    x4 = jax.random.normal(k_x2, (N4, Cin, H, W), jnp.float32)
    ref4 = genblock_reference(x4, params)
    fwd4 = make_genblock(params, batch=N4, height=H, width=W)
    out4 = jax.block_until_ready(fwd4(x4))
    err4 = float(jnp.max(jnp.abs(out4 - ref4)))
    assert err4 < 5e-2, f"batched path max abs error too large: {err4}"

    print("KERNEL_OK")
</pallas_src>

<mosaic_0001>
module attributes {stable_mosaic.version = 11 : i64} {
  func.func @_genblock_kernel(%arg0: i32, %arg1: memref<1x42x256xf32, #tpu.memory_space<vmem>>, %arg2: memref<2x42x256xf32, #tpu.memory_space<vmem>>, %arg3: memref<3x256x384xf32, #tpu.memory_space<vmem>>, %arg4: memref<2x40x384xf32, #tpu.memory_space<vmem>>, %arg5: memref<3x384x256xf32, #tpu.memory_space<vmem>>, %arg6: memref<256x256xf32, #tpu.memory_space<vmem>>, %arg7: memref<1x32x256xf32, #tpu.memory_space<vmem>>) attributes {dimension_semantics = [#tpu.dimension_semantics<parallel>], iteration_bounds = array<i64: 2>, scalar_prefetch = 0 : i64, scratch_operands = 0 : i64, tpu.core_type = #tpu.core_type<tc>, window_params = [{transform_indices = @transform_0, window_bounds = array<i64: 1, 42, 256>}, {pipeline_mode = #tpu.pipeline_mode<synchronous>, transform_indices = @transform_1, window_bounds = array<i64: 2, 42, 256>}, {pipeline_mode = #tpu.pipeline_mode<synchronous>, transform_indices = @transform_2, window_bounds = array<i64: 3, 256, 384>}, {pipeline_mode = #tpu.pipeline_mode<synchronous>, transform_indices = @transform_3, window_bounds = array<i64: 2, 40, 384>}, {pipeline_mode = #tpu.pipeline_mode<synchronous>, transform_indices = @transform_4, window_bounds = array<i64: 3, 384, 256>}, {pipeline_mode = #tpu.pipeline_mode<synchronous>, transform_indices = @transform_5, window_bounds = array<i64: 256, 256>}, {transform_indices = @transform_6, window_bounds = array<i64: 1, 32, 256>}]} {
    %c0 = arith.constant 0 : index
    %c0_0 = arith.constant 0 : index
    %c0_1 = arith.constant 0 : index
    %0 = vector.load %arg1[%c0, %c0_0, %c0_1] : memref<1x42x256xf32, #tpu.memory_space<vmem>>, vector<1x42x256xf32>
    %1 = vector.shape_cast %0 : vector<1x42x256xf32> to vector<42x256xf32>
    %c0_2 = arith.constant 0 : index
    %c0_3 = arith.constant 0 : index
    %c0_4 = arith.constant 0 : index
    %2 = vector.load %arg2[%c0_2, %c0_3, %c0_4] : memref<2x42x256xf32, #tpu.memory_space<vmem>>, vector<1x42x256xf32>
    %3 = vector.shape_cast %2 : vector<1x42x256xf32> to vector<42x256xf32>
    %4 = arith.mulf %1, %3 : vector<42x256xf32>
    %c1 = arith.constant 1 : index
    %c0_5 = arith.constant 0 : index
    %c0_6 = arith.constant 0 : index
    %5 = vector.load %arg2[%c1, %c0_5, %c0_6] : memref<2x42x256xf32, #tpu.memory_space<vmem>>, vector<1x42x256xf32>
    %6 = vector.shape_cast %5 : vector<1x42x256xf32> to vector<42x256xf32>
    %7 = arith.addf %4, %6 : vector<42x256xf32>
    %cst = arith.constant 0.000000e+00 : f32
    %8 = vector.broadcast %cst : f32 to vector<42x256xf32>
    %9 = arith.maximumf %7, %8 : vector<42x256xf32>
    %10 = vector.extract_strided_slice %9 {offsets = [0, 0], sizes = [40, 256], strides = [1, 1]} : vector<42x256xf32> to vector<40x256xf32>
    %c0_7 = arith.constant 0 : index
    %c0_8 = arith.constant 0 : index
    %c0_9 = arith.constant 0 : index
    %11 = vector.load %arg3[%c0_7, %c0_8, %c0_9] : memref<3x256x384xf32, #tpu.memory_space<vmem>>, vector<1x256x384xf32>
    %12 = vector.shape_cast %11 : vector<1x256x384xf32> to vector<256x384xf32>
    %cst_10 = arith.constant dense<0.000000e+00> : vector<40x384xf32>
    %13 = tpu.matmul %10, %12, %cst_10 {dimension_numbers = #tpu.dot_dimension_numbers<[1], [0], [0], [1], [0, 0, 1, 1], [], []>} : vector<40x256xf32>, vector<256x384xf32>, vector<40x384xf32> -> vector<40x384xf32>
    %14 = vector.extract_strided_slice %9 {offsets = [1, 0], sizes = [40, 256], strides = [1, 1]} : vector<42x256xf32> to vector<40x256xf32>
    %c1_11 = arith.constant 1 : index
    %c0_12 = arith.constant 0 : index
    %c0_13 = arith.constant 0 : index
    %15 = vector.load %arg3[%c1_11, %c0_12, %c0_13] : memref<3x256x384xf32, #tpu.memory_space<vmem>>, vector<1x256x384xf32>
    %16 = vector.shape_cast %15 : vector<1x256x384xf32> to vector<256x384xf32>
    %cst_14 = arith.constant dense<0.000000e+00> : vector<40x384xf32>
    %17 = tpu.matmul %14, %16, %cst_14 {dimension_numbers = #tpu.dot_dimension_numbers<[1], [0], [0], [1], [0, 0, 1, 1], [], []>} : vector<40x256xf32>, vector<256x384xf32>, vector<40x384xf32> -> vector<40x384xf32>
    %18 = arith.addf %13, %17 : vector<40x384xf32>
    %19 = vector.extract_strided_slice %9 {offsets = [2, 0], sizes = [40, 256], strides = [1, 1]} : vector<42x256xf32> to vector<40x256xf32>
    %c2 = arith.constant 2 : index
    %c0_15 = arith.constant 0 : index
    %c0_16 = arith.constant 0 : index
    %20 = vector.load %arg3[%c2, %c0_15, %c0_16] : memref<3x256x384xf32, #tpu.memory_space<vmem>>, vector<1x256x384xf32>
    %21 = vector.shape_cast %20 : vector<1x256x384xf32> to vector<256x384xf32>
    %cst_17 = arith.constant dense<0.000000e+00> : vector<40x384xf32>
    %22 = tpu.matmul %19, %21, %cst_17 {dimension_numbers = #tpu.dot_dimension_numbers<[1], [0], [0], [1], [0, 0, 1, 1], [], []>} : vector<40x256xf32>, vector<256x384xf32>, vector<40x384xf32> -> vector<40x384xf32>
    %23 = arith.addf %18, %22 : vector<40x384xf32>
    %c0_18 = arith.constant 0 : index
    %c0_19 = arith.constant 0 : index
    %c0_20 = arith.constant 0 : index
    %24 = vector.load %arg4[%c0_18, %c0_19, %c0_20] : memref<2x40x384xf32, #tpu.memory_space<vmem>>, vector<1x40x384xf32>
    %25 = vector.shape_cast %24 : vector<1x40x384xf32> to vector<40x384xf32>
    %26 = arith.mulf %23, %25 : vector<40x384xf32>
    %c1_21 = arith.constant 1 : index
    %c0_22 = arith.constant 0 : index
    %c0_23 = arith.constant 0 : index
    %27 = vector.load %arg4[%c1_21, %c0_22, %c0_23] : memref<2x40x384xf32, #tpu.memory_space<vmem>>, vector<1x40x384xf32>
    %28 = vector.shape_cast %27 : vector<1x40x384xf32> to vector<40x384xf32>
    %29 = arith.addf %26, %28 : vector<40x384xf32>
    %cst_24 = arith.constant 0.000000e+00 : f32
    %30 = vector.broadcast %cst_24 : f32 to vector<40x384xf32>
    %31 = arith.maximumf %29, %30 : vector<40x384xf32>
    %32 = vector.extract_strided_slice %31 {offsets = [0, 0], sizes = [32, 384], strides = [1, 1]} : vector<40x384xf32> to vector<32x384xf32>
    %c0_25 = arith.constant 0 : index
    %c0_26 = arith.constant 0 : index
    %c0_27 = arith.constant 0 : index
    %33 = vector.load %arg5[%c0_25, %c0_26, %c0_27] : memref<3x384x256xf32, #tpu.memory_space<vmem>>, vector<1x384x256xf32>
    %34 = vector.shape_cast %33 : vector<1x384x256xf32> to vector<384x256xf32>
    %cst_28 = arith.constant dense<0.000000e+00> : vector<32x256xf32>
    %35 = tpu.matmul %32, %34, %cst_28 {dimension_numbers = #tpu.dot_dimension_numbers<[1], [0], [0], [1], [0, 0, 1, 1], [], []>} : vector<32x384xf32>, vector<384x256xf32>, vector<32x256xf32> -> vector<32x256xf32>
    %36 = vector.extract_strided_slice %31 {offsets = [1, 0], sizes = [32, 384], strides = [1, 1]} : vector<40x384xf32> to vector<32x384xf32>
    %c1_29 = arith.constant 1 : index
    %c0_30 = arith.constant 0 : index
    %c0_31 = arith.constant 0 : index
    %37 = vector.load %arg5[%c1_29, %c0_30, %c0_31] : memref<3x384x256xf32, #tpu.memory_space<vmem>>, vector<1x384x256xf32>
    %38 = vector.shape_cast %37 : vector<1x384x256xf32> to vector<384x256xf32>
    %cst_32 = arith.constant dense<0.000000e+00> : vector<32x256xf32>
    %39 = tpu.matmul %36, %38, %cst_32 {dimension_numbers = #tpu.dot_dimension_numbers<[1], [0], [0], [1], [0, 0, 1, 1], [], []>} : vector<32x384xf32>, vector<384x256xf32>, vector<32x256xf32> -> vector<32x256xf32>
    %40 = arith.addf %35, %39 : vector<32x256xf32>
    %41 = vector.extract_strided_slice %31 {offsets = [2, 0], sizes = [32, 384], strides = [1, 1]} : vector<40x384xf32> to vector<32x384xf32>
    %c2_33 = arith.constant 2 : index
    %c0_34 = arith.constant 0 : index
    %c0_35 = arith.constant 0 : index
    %42 = vector.load %arg5[%c2_33, %c0_34, %c0_35] : memref<3x384x256xf32, #tpu.memory_space<vmem>>, vector<1x384x256xf32>
    %43 = vector.shape_cast %42 : vector<1x384x256xf32> to vector<384x256xf32>
    %cst_36 = arith.constant dense<0.000000e+00> : vector<32x256xf32>
    %44 = tpu.matmul %41, %43, %cst_36 {dimension_numbers = #tpu.dot_dimension_numbers<[1], [0], [0], [1], [0, 0, 1, 1], [], []>} : vector<32x384xf32>, vector<384x256xf32>, vector<32x256xf32> -> vector<32x256xf32>
    %45 = arith.addf %40, %44 : vector<32x256xf32>
    %46 = vector.extract_strided_slice %1 {offsets = [2, 0], sizes = [32, 256], strides = [1, 1]} : vector<42x256xf32> to vector<32x256xf32>
    %c0_37 = arith.constant 0 : index
    %c0_38 = arith.constant 0 : index
    %47 = vector.load %arg6[%c0_37, %c0_38] : memref<256x256xf32, #tpu.memory_space<vmem>>, vector<256x256xf32>
    %cst_39 = arith.constant dense<0.000000e+00> : vector<32x256xf32>
    %48 = tpu.matmul %46, %47, %cst_39 {dimension_numbers = #tpu.dot_dimension_numbers<[1], [0], [0], [1], [0, 0, 1, 1], [], []>} : vector<32x256xf32>, vector<256x256xf32>, vector<32x256xf32> -> vector<32x256xf32>
    %49 = arith.addf %45, %48 : vector<32x256xf32>
    %c0_40 = arith.constant 0 : index
    %c0_41 = arith.constant 0 : index
    %c0_42 = arith.constant 0 : index
    %50 = vector.load %arg7[%c0_40, %c0_41, %c0_42] : memref<1x32x256xf32, #tpu.memory_space<vmem>>, vector<1x32x256xf32>
    %51 = vector.shape_cast %50 : vector<1x32x256xf32> to vector<32x256xf32>
    %52 = vector.shape_cast %49 : vector<32x256xf32> to vector<1x32x256xf32>
    tpu.vector_store %arg7[%c0_40, %c0_41, %c0_42], %52 {strides = array<i32>} : memref<1x32x256xf32, #tpu.memory_space<vmem>>, vector<1x32x256xf32>,
    return
  }
  func.func @transform_0(%arg0: i32) -> (i32, i32, i32) {
    %c0_i32 = arith.constant 0 : i32
    %c0_i32_0 = arith.constant 0 : i32
    %c0_i32_1 = arith.constant 0 : i32
    return %arg0, %c0_i32, %c0_i32_0 : i32, i32, i32
  }
  func.func @transform_1(%arg0: i32) -> (i32, i32, i32) {
    %c0_i32 = arith.constant 0 : i32
    %c0_i32_0 = arith.constant 0 : i32
    %c0_i32_1 = arith.constant 0 : i32
    %c0_i32_2 = arith.constant 0 : i32
    return %c0_i32, %c0_i32_0, %c0_i32_1 : i32, i32, i32
  }
  func.func @transform_2(%arg0: i32) -> (i32, i32, i32) {
    %c0_i32 = arith.constant 0 : i32
    %c0_i32_0 = arith.constant 0 : i32
    %c0_i32_1 = arith.constant 0 : i32
    %c0_i32_2 = arith.constant 0 : i32
    return %c0_i32, %c0_i32_0, %c0_i32_1 : i32, i32, i32
  }
  func.func @transform_3(%arg0: i32) -> (i32, i32, i32) {
    %c0_i32 = arith.constant 0 : i32
    %c0_i32_0 = arith.constant 0 : i32
    %c0_i32_1 = arith.constant 0 : i32
    %c0_i32_2 = arith.constant 0 : i32
    return %c0_i32, %c0_i32_0, %c0_i32_1 : i32, i32, i32
  }
  func.func @transform_4(%arg0: i32) -> (i32, i32, i32) {
    %c0_i32 = arith.constant 0 : i32
    %c0_i32_0 = arith.constant 0 : i32
    %c0_i32_1 = arith.constant 0 : i32
    %c0_i32_2 = arith.constant 0 : i32
    return %c0_i32, %c0_i32_0, %c0_i32_1 : i32, i32, i32
  }
  func.func @transform_5(%arg0: i32) -> (i32, i32) {
    %c0_i32 = arith.constant 0 : i32
    %c0_i32_0 = arith.constant 0 : i32
    %c0_i32_1 = arith.constant 0 : i32
    return %c0_i32, %c0_i32_0 : i32, i32
  }
  func.func @transform_6(%arg0: i32) -> (i32, i32, i32) {
    %c0_i32 = arith.constant 0 : i32
    %c0_i32_0 = arith.constant 0 : i32
    %c0_i32_1 = arith.constant 0 : i32
    return %arg0, %c0_i32, %c0_i32_0 : i32, i32, i32
  }
}

</mosaic_0001>

<llo_original>
// kernel: forward.1
$region0: #{forward.1}
  #allocation0 [shape = 'u32[]', space=smem, size = 0x4, offset = 0x4, fixed_abs, tag = 'smem constant byte address 0x4 - core index']
  #allocation1 [shape = 'u32[72,128]{1,0:T(1,128)}', space=vmem, size = 0x9000, scoped, tag = 'internal scratch']
  %s0 = inlined_call_operand.vmem [shape: f32[2,42,256], index: 0, kind: input, shape index: {}]
  %s1 = inlined_call_operand.hbm [shape: f32[2,42,256], index: 1, kind: input, shape index: {}]
  %s2 = inlined_call_operand.hbm [shape: f32[3,256,384], index: 2, kind: input, shape index: {}]
  %s3 = inlined_call_operand.vmem [shape: f32[2,40,384], index: 3, kind: input, shape index: {}]
  %s4 = inlined_call_operand.vmem [shape: f32[3,384,256], index: 4, kind: input, shape index: {}]
  %s5 = inlined_call_operand.hbm [shape: f32[256,256], index: 5, kind: input, shape index: {}]
  %s6 = inlined_call_operand.vmem [shape: f32[2,32,256], index: 6, kind: output, shape index: {}]
  %s7 = sld [smem:[#allocation0]]
  $region69: #{forward.1} parent=0
    _
  %s9 = ssub.s32 1, %s7
  %s10 = scalar_select 0, %s9, %s7
  $region1: #{forward.1} parent=0
    #allocation2 [shape = 'u8[98304]{0}', space=vmem, size = 0x18000, scoped, tag = 'input window, operand 1, single buffered']
    #allocation3 [shape = 's32[2]{0}', space=sflag, size = 0x8, scoped, tag = 'scoped memory for forward.1']
    #allocation4 [shape = 'u8[1179648]{0}', space=vmem, size = 0x120000, scoped, tag = 'input window, operand 2, single buffered']
    #allocation5 [shape = 's32[1]{0}', space=sflag, size = 0x4, scoped, tag = 'scoped memory for forward.1']
    #allocation6 [shape = 'u8[262144]{0}', space=vmem, size = 0x40000, scoped, tag = 'input window, operand 5, single buffered']
    %11 = vsyncpa [#allocation3], 0
    %12 = vsyncpa [#allocation5], 0
    loop: start=0, step=1, limit=4
    $region2: #{forward.1} parent=1 // loop_pre_header
      _
    $region3: #{forward.1} parent=1 // loop_header
      %s14 = sphi 0, %s18
      %p15 = scmp.ge.s32.totalorder %s14, 4
      %s24 = sphi 0, %s26
      %s27 = sphi 0, %s24
      %s28 = sphi 0, %s27
      %s44 = sphi 0, %s28
      %s48 = sphi 0, %s48
      %s50 = sphi 0, %s48
      %s51 = sphi 0, %s50
      %s65 = sphi 0, %s51
      %s69 = sphi 0, %s69
      %s71 = sphi 0, %s69
      %s72 = sphi 0, %s71
      %s86 = sphi 0, %s72
      %s90 = sphi 0, %s90
      %s92 = sphi 0, %s90
      %s93 = sphi 0, %s92
      %s107 = sphi 0, %s93
      %s111 = sphi 0, %s111
      %s113 = sphi 0, %s111
      %s114 = sphi 0, %s113
      %s128 = sphi 0, %s114
      %s132 = sphi 0, %s132
      %s134 = sphi 0, %s132
      %s135 = sphi 0, %s134
      %s149 = sphi 0, %s135
      %s155 = sphi 0, %s157
      %s158 = sphi 0, %s155
      %s159 = sphi 0, %s158
      %s175 = sphi 0, %s159
    $region4: #{forward.1} parent=1 // loop_header_branch
      %17 = sbr.rel (%p15) target = $region8
    $region5: #{forward.1} parent=1 // loop_body
      %s19 = ssub.s32 %s14, 1
      %s20 = ssub.s32 %s14, 2
      %s21 = sadd.s32 %s14, 1
      %s22 = ssub.s32 %s14, %s21
      %p23 = scmp.eq.s32.totalorder %s22, 0
      %s25 = sadd.s32 %s24, 1
      %s26 = scalar_select %p23, %s24, %s25
      %p29 = pneg %p23
      %p30 = scmp.eq.s32.totalorder %s14, 1
      %p31 = por %p29, %p30
      %p32 = scmp.ne.s32.totalorder %s24, %s27
      %p33 = scmp.eq.s32.totalorder %s14, 0
      %p34 = por %p32, %p33
      %p35 = scmp.ne.s32.totalorder %s24, %s27
      %p36 = scmp.eq.s32.totalorder %s19, 1
      %p37 = por %p35, %p36
      %p38 = scmp.ne.s32.totalorder %s27, %s28
      %p39 = scmp.eq.s32.totalorder %s19, 0
      %p40 = por %p38, %p39
      %p41 = scmp.ne.s32.totalorder %s27, %s28
      %p42 = scmp.eq.s32.totalorder %s20, 1
      %p43 = por %p41, %p42
      %p45 = scmp.ne.s32.totalorder %s28, %s44
      %p46 = scmp.eq.s32.totalorder %s20, 0
      %p47 = por %p45, %p46
      %s49 = sadd.s32 %s48, 1
      %p52 = scmp.eq.s32.totalorder %s14, 1
      %p53 = scmp.ne.s32.totalorder %s48, %s50
      %p54 = scmp.eq.s32.totalorder %s14, 0
      %p55 = por %p53, %p54
      %p56 = scmp.ne.s32.totalorder %s48, %s50
      %p57 = scmp.eq.s32.totalorder %s19, 1
      %p58 = por %p56, %p57
      %p59 = scmp.ne.s32.totalorder %s50, %s51
      %p60 = scmp.eq.s32.totalorder %s19, 0
      %p61 = por %p59, %p60
      %p62 = scmp.ne.s32.totalorder %s50, %s51
      %p63 = scmp.eq.s32.totalorder %s20, 1
      %p64 = por %p62, %p63
      %p66 = scmp.ne.s32.totalorder %s51, %s65
      %p67 = scmp.eq.s32.totalorder %s20, 0
      %p68 = por %p66, %p67
      %s70 = sadd.s32 %s69, 1
      %p73 = scmp.eq.s32.totalorder %s14, 1
      %p74 = scmp.ne.s32.totalorder %s69, %s71
      %p75 = scmp.eq.s32.totalorder %s14, 0
      %p76 = por %p74, %p75
      %p77 = scmp.ne.s32.totalorder %s69, %s71
      %p78 = scmp.eq.s32.totalorder %s19, 1
      %p79 = por %p77, %p78
      %p80 = scmp.ne.s32.totalorder %s71, %s72
      %p81 = scmp.eq.s32.totalorder %s19, 0
      %p82 = por %p80, %p81
      %p83 = scmp.ne.s32.totalorder %s71, %s72
      %p84 = scmp.eq.s32.totalorder %s20, 1
      %p85 = por %p83, %p84
      %p87 = scmp.ne.s32.totalorder %s72, %s86
      %p88 = scmp.eq.s32.totalorder %s20, 0
      %p89 = por %p87, %p88
      %s91 = sadd.s32 %s90, 1
      %p94 = scmp.eq.s32.totalorder %s14, 1
      %p95 = scmp.ne.s32.totalorder %s90, %s92
      %p96 = scmp.eq.s32.totalorder %s14, 0
      %p97 = por %p95, %p96
      %p98 = scmp.ne.s32.totalorder %s90, %s92
      %p99 = scmp.eq.s32.totalorder %s19, 1
      %p100 = por %p98, %p99
      %p101 = scmp.ne.s32.totalorder %s92, %s93
      %p102 = scmp.eq.s32.totalorder %s19, 0
      %p103 = por %p101, %p102
      %p104 = scmp.ne.s32.totalorder %s92, %s93
      %p105 = scmp.eq.s32.totalorder %s20, 1
      %p106 = por %p104, %p105
      %p108 = scmp.ne.s32.totalorder %s93, %s107
      %p109 = scmp.eq.s32.totalorder %s20, 0
      %p110 = por %p108, %p109
      %s112 = sadd.s32 %s111, 1
      %p115 = scmp.eq.s32.totalorder %s14, 1
      %p116 = scmp.ne.s32.totalorder %s111, %s113
      %p117 = scmp.eq.s32.totalorder %s14, 0
      %p118 = por %p116, %p117
      %p119 = scmp.ne.s32.totalorder %s111, %s113
      %p120 = scmp.eq.s32.totalorder %s19, 1
      %p121 = por %p119, %p120
      %p122 = scmp.ne.s32.totalorder %s113, %s114
      %p123 = scmp.eq.s32.totalorder %s19, 0
      %p124 = por %p122, %p123
      %p125 = scmp.ne.s32.totalorder %s113, %s114
      %p126 = scmp.eq.s32.totalorder %s20, 1
      %p127 = por %p125, %p126
      %p129 = scmp.ne.s32.totalorder %s114, %s128
      %p130 = scmp.eq.s32.totalorder %s20, 0
      %p131 = por %p129, %p130
      %s133 = sadd.s32 %s132, 1
      %p136 = scmp.eq.s32.totalorder %s14, 1
      %p137 = scmp.ne.s32.totalorder %s132, %s134
      %p138 = scmp.eq.s32.totalorder %s14, 0
      %p139 = por %p137, %p138
      %p140 = scmp.ne.s32.totalorder %s132, %s134
      %p141 = scmp.eq.s32.totalorder %s19, 1
      %p142 = por %p140, %p141
      %p143 = scmp.ne.s32.totalorder %s134, %s135
      %p144 = scmp.eq.s32.totalorder %s19, 0
      %p145 = por %p143, %p144
      %p146 = scmp.ne.s32.totalorder %s134, %s135
      %p147 = scmp.eq.s32.totalorder %s20, 1
      %p148 = por %p146, %p147
      %p150 = scmp.ne.s32.totalorder %s135, %s149
      %p151 = scmp.eq.s32.totalorder %s20, 0
      %p152 = por %p150, %p151
      %s153 = ssub.s32 %s14, %s21
      %p154 = scmp.eq.s32.totalorder %s153, 0
      %s156 = sadd.s32 %s155, 1
      %s157 = scalar_select %p154, %s155, %s156
      %p160 = pneg %p154
      %p161 = scmp.eq.s32.totalorder %s14, 1
      %p162 = por %p160, %p161
      %p163 = scmp.ne.s32.totalorder %s155, %s158
      %p164 = scmp.eq.s32.totalorder %s14, 0
      %p165 = por %p163, %p164
      %p166 = scmp.ne.s32.totalorder %s155, %s158
      %p167 = scmp.eq.s32.totalorder %s19, 1
      %p168 = por %p166, %p167
      %p169 = scmp.ne.s32.totalorder %s158, %s159
      %p170 = scmp.eq.s32.totalorder %s19, 0
      %p171 = por %p169, %p170
      %p172 = scmp.ne.s32.totalorder %s158, %s159
      %p173 = scmp.eq.s32.totalorder %s20, 1
      %p174 = por %p172, %p173
      %p176 = scmp.ne.s32.totalorder %s159, %s175
      %p177 = scmp.eq.s32.totalorder %s20, 0
      %p178 = por %p176, %p177
      %p179 = scmp.le.s32.totalorder 1, %s14
      %p180 = scmp.lt.s32.totalorder %s14, 3
      %p181 = pnand %p179, %p180
      %p182 = pneg %p181
      // Predicated region
      $region9: #{forward.1} parent=5 // pred_check
        _
      $region10: #{forward.1} parent=5 // pred_check_branch
        %184 = sbr.rel (%p181) target = $region12
      $region11: #{forward.1} parent=5 // pred_region
        %s185 = ssub.s32 %s14, 1
        // Predicated region
        $region13: #{forward.1} parent=11 // pred_check
          %p186 = pneg %p61
        $region14: #{forward.1} parent=11 // pred_check_branch
          %188 = sbr.rel (%p186) target = $region16
        $region15: #{forward.1} parent=11 // pred_region
          %190 = vsyncadd [#allocation3], 0
          %s191 = sshll.u32 %s1, 4
          %s192 = int_to_ptr.hbm [resolvable:$true] %s191
          %s193 = sshll.u32 [#allocation2], 4
          %s194 = int_to_ptr.vmem [resolvable:$true] %s193
          %199 = dma.hbm_to_vmem [thread:$0]  %s192, 3072, %s194, [#allocation3], 256, 256, 16
        $region16: #{forward.1} parent=11 // pred_fallthru
          _
        // Predicated region
        $region17: #{forward.1} parent=11 // pred_check
          %p200 = pneg %p82
        $region18: #{forward.1} parent=11 // pred_check_branch
          %202 = sbr.rel (%p200) target = $region20
        $region19: #{forward.1} parent=11 // pred_region
          %204 = vsyncadd [#allocation5], 0
          %s205 = sshll.u32 %s2, 4
          %s206 = int_to_ptr.hbm [resolvable:$true] %s205
          %s207 = sshll.u32 [#allocation4], 4
          %s208 = int_to_ptr.vmem [resolvable:$true] %s207
          %213 = dma.hbm_to_vmem [thread:$0]  %s206, 36864, %s208, [#allocation5], 384, 384, 24
        $region20: #{forward.1} parent=11 // pred_fallthru
          _
        // Predicated region
        $region21: #{forward.1} parent=11 // pred_check
          %p214 = pneg %p103
        $region22: #{forward.1} parent=11 // pred_check_branch
          %216 = sbr.rel (%p214) target = $region24
        $region23: #{forward.1} parent=11 // pred_region
          _
        $region24: #{forward.1} parent=11 // pred_fallthru
          _
        // Predicated region
        $region25: #{forward.1} parent=11 // pred_check
          %p217 = pneg %p124
        $region26: #{forward.1} parent=11 // pred_check_branch
          %219 = sbr.rel (%p217) target = $region28
        $region27: #{forward.1} parent=11 // pred_region
          _
        $region28: #{forward.1} parent=11 // pred_fallthru
          _
        // Predicated region
        $region29: #{forward.1} parent=11 // pred_check
          %p220 = pneg %p145
        $region30: #{forward.1} parent=11 // pred_check_branch
          %222 = sbr.rel (%p220) target = $region32
        $region31: #{forward.1} parent=11 // pred_region
          %224 = vsyncadd [#allocation5], 0
          %s225 = sshll.u32 %s5, 4
          %s226 = int_to_ptr.hbm [resolvable:$true] %s225
          %s227 = sshll.u32 [#allocation6], 4
          %s228 = int_to_ptr.vmem [resolvable:$true] %s227
          %233 = dma.hbm_to_vmem [thread:$0]  %s226, 8192, %s228, [#allocation5], 256, 256, 16
        $region32: #{forward.1} parent=11 // pred_fallthru
          _
      $region12: #{forward.1} parent=5 // pred_fallthru
        _
      %p234 = scmp.lt.s32.totalorder %s14, 2
      // Predicated region
      $region33: #{forward.1} parent=5 // pred_check
        %p235 = pneg %p234
      $region34: #{forward.1} parent=5 // pred_check_branch
        %237 = sbr.rel (%p235) target = $region36
      $region35: #{forward.1} parent=5 // pred_region
        // Predicated region
        $region37: #{forward.1} parent=35 // pred_check
          %p238 = pneg %p34
        $region38: #{forward.1} parent=35 // pred_check_branch
          %240 = sbr.rel (%p238) target = $region40
        $region39: #{forward.1} parent=35 // pred_region
          %p241 = scmp.lt.s32.totalorder %s14, 1
          %s242 = scalar_select %p241, %s14, 1
          %s243 = smul.addr %s242, 12
          %s244 = smul.addr %s243, 8
          %s245 = scalar_lea.vmem %s0, %s244
        $region40: #{forward.1} parent=35 // pred_fallthru
          _
      $region36: #{forward.1} parent=5 // pred_fallthru
        _
      %p246 = scmp.le.s32.totalorder 1, %s14
      %p247 = scmp.lt.s32.totalorder %s14, 3
      %p248 = pnand %p246, %p247
      %p249 = pneg %p248
      // Predicated region
      $region41: #{forward.1} parent=5 // pred_check
        _
      $region42: #{forward.1} parent=5 // pred_check_branch
        %251 = sbr.rel (%p248) target = $region44
      $region43: #{forward.1} parent=5 // pred_region
        %s252 = ssub.s32 %s14, 1
        // Predicated region
        $region45: #{forward.1} parent=43 // pred_check
          %p253 = pneg %p61
        $region46: #{forward.1} parent=43 // pred_check_branch
          %255 = sbr.rel (%p253) target = $region48
        $region47: #{forward.1} parent=43 // pred_region
          %257 = dma.done [#allocation3], 3072
        $region48: #{forward.1} parent=43 // pred_fallthru
          _
        // Predicated region
        $region49: #{forward.1} parent=43 // pred_check
          %p258 = pneg %p82
        $region50: #{forward.1} parent=43 // pred_check_branch
          %260 = sbr.rel (%p258) target = $region52
        $region51: #{forward.1} parent=43 // pred_region
          %262 = dma.done [#allocation5], 36864
        $region52: #{forward.1} parent=43 // pred_fallthru
          _
        // Predicated region
        $region53: #{forward.1} parent=43 // pred_check
          %p263 = pneg %p145
        $region54: #{forward.1} parent=43 // pred_check_branch
          %265 = sbr.rel (%p263) target = $region56
        $region55: #{forward.1} parent=43 // pred_region
          %267 = dma.done [#allocation5], 8192
        $region56: #{forward.1} parent=43 // pred_fallthru
          _
        %p268 = scmp.lt.s32.totalorder %s19, 1
        %s269 = scalar_select %p268, %s19, 1
        %s270 = smul.addr %s269, 12
        %s271 = smul.addr %s270, 8
        %s272 = scalar_lea.vmem %s0, %s271
        %p273 = pneg %p40
        %p274 = pneg %p37
        %p275 = pneg %p61
        %p276 = pneg %p58
        %p277 = pneg %p82
        %p278 = pneg %p79
        %p279 = pneg %p103
        %p280 = pneg %p100
        %p281 = pneg %p124
        %p282 = pneg %p121
        %p283 = pneg %p145
        %p284 = pneg %p142
        %p285 = pneg %p171
        %p286 = pneg %p168
        %p287 = scmp.lt.s32.totalorder %s19, 1
        %s288 = scalar_select %p287, %s19, 1
        %s289 = smul.addr %s288, 8
        %s290 = smul.addr %s289, 8
        %s291 = scalar_lea.vmem %s6, %s290
        %p292 = scmp.lt.s32.totalorder %s19, 1
        %s293 = scalar_select %p292, %s19, 1
        %s294 = smul.addr %s293, 12
        %s295 = smul.addr %s294, 8
        %s296 = scalar_lea.vmem %s0, %s295
        %p297 = scmp.lt.s32.totalorder %s19, 1
        %s298 = scalar_select %p297, %s19, 1
        %s299 = smul.addr %s298, 8
        %s300 = smul.addr %s299, 8
        %s301 = scalar_lea.vmem %s6, %s300
        %v302 = vld [vmem:[%s296] sm:$0xff]
        %v303 = vld [vmem:[%s296 + $0x8] sm:$0xff]
        %v304 = vld [vmem:[%s296 + $0x10] sm:$0xff]
        %v305 = vld [vmem:[%s296 + $0x18] sm:$0xff]
        %v306 = vld [vmem:[%s296 + $0x20] sm:$0xff]
        %v307 = vld [vmem:[%s296 + $0x28] sm:$0xff]
        %v308 = vld [vmem:[%s296 + $0x30] sm:$0xff]
        %v309 = vld [vmem:[%s296 + $0x38] sm:$0xff]
        %v310 = vld [vmem:[%s296 + $0x40] sm:$0xff]
        %v311 = vld [vmem:[%s296 + $0x48] sm:$0xff]
        %v312 = vld [vmem:[%s296 + $0x50] sm:$0x3]
        %v313 = vld [vmem:[%s296 + $0x58] sm:$0x3]
        %v314 = vld [vmem:[#allocation2] sm:$0xff]
        %v315 = vld [vmem:[#allocation2 + $0x8] sm:$0xff]
        %v316 = vld [vmem:[#allocation2 + $0x10] sm:$0xff]
        %v317 = vld [vmem:[#allocation2 + $0x18] sm:$0xff]
        %v318 = vld [vmem:[#allocation2 + $0x20] sm:$0xff]
        %v319 = vld [vmem:[#allocation2 + $0x28] sm:$0xff]
        %v320 = vld [vmem:[#allocation2 + $0x30] sm:$0xff]
        %v321 = vld [vmem:[#allocation2 + $0x38] sm:$0xff]
        %v322 = vld [vmem:[#allocation2 + $0x40] sm:$0xff]
        %v323 = vld [vmem:[#allocation2 + $0x48] sm:$0xff]
        %v324 = vld [vmem:[#allocation2 + $0x50] sm:$0x3]
        %v325 = vld [vmem:[#allocation2 + $0x58] sm:$0x3]
        %v326 = vmul.f32 %v302, %v314
        %v327 = vmul.f32 %v303, %v315
        %v328 = vmul.f32 %v304, %v316
        %v329 = vmul.f32 %v305, %v317
        %v330 = vmul.f32 %v306, %v318
        %v331 = vmul.f32 %v307, %v319
        %v332 = vmul.f32 %v308, %v320
        %v333 = vmul.f32 %v309, %v321
        %v334 = vmul.f32 %v310, %v322
        %v335 = vmul.f32 %v311, %v323
        %v336 = vmul.f32 %v312, %v324
        %v337 = vmul.f32 %v313, %v325
        %s338 = scalar_lea.vmem [#allocation2], 96
        %v339 = vld [vmem:[%s338] sm:$0xff]
        %v340 = vld [vmem:[%s338 + $0x8] sm:$0xff]
        %v341 = vld [vmem:[%s338 + $0x10] sm:$0xff]
        %v342 = vld [vmem:[%s338 + $0x18] sm:$0xff]
        %v343 = vld [vmem:[%s338 + $0x20] sm:$0xff]
        %v344 = vld [vmem:[%s338 + $0x28] sm:$0xff]
        %v345 = vld [vmem:[%s338 + $0x30] sm:$0xff]
        %v346 = vld [vmem:[%s338 + $0x38] sm:$0xff]
        %v347 = vld [vmem:[%s338 + $0x40] sm:$0xff]
        %v348 = vld [vmem:[%s338 + $0x48] sm:$0xff]
        %v349 = vld [vmem:[%s338 + $0x50] sm:$0x3]
        %v350 = vld [vmem:[%s338 + $0x58] sm:$0x3]
        %v351 = vadd.f32 %v326, %v339
        %v352 = vadd.f32 %v327, %v340
        %v353 = vadd.f32 %v328, %v341
        %v354 = vadd.f32 %v329, %v342
        %v355 = vadd.f32 %v330, %v343
        %v356 = vadd.f32 %v331, %v344
        %v357 = vadd.f32 %v332, %v345
        %v358 = vadd.f32 %v333, %v346
        %v359 = vadd.f32 %v334, %v347
        %v360 = vadd.f32 %v335, %v348
        %v361 = vadd.f32 %v336, %v349
        %v362 = vadd.f32 %v337, %v350
        %v363 = vmax.f32 %v351, 0.0
        %v364 = vmax.f32 %v352, 0.0
        %v365 = vmax.f32 %v353, 0.0
        %v366 = vmax.f32 %v354, 0.0
        %v367 = vmax.f32 %v355, 0.0
        %v368 = vmax.f32 %v356, 0.0
        %v369 = vmax.f32 %v357, 0.0
        %v370 = vmax.f32 %v358, 0.0
        %v371 = vmax.f32 %v359, 0.0
        %v372 = vmax.f32 %v360, 0.0
        %v373 = vmax.f32 %v361, 0.0
        %v374 = vmax.f32 %v362, 0.0
        %v375 = vld [vmem:[#allocation4] sm:$0xff]
        %v376 = vld [vmem:[#allocation4 + $0x8] sm:$0xff]
        %v377 = vld [vmem:[#allocation4 + $0x10] sm:$0xff]
        %v378 = vld [vmem:[#allocation4 + $0x18] sm:$0xff]
        %v379 = vld [vmem:[#allocation4 + $0x20] sm:$0xff]
        %v380 = vld [vmem:[#allocation4 + $0x28] sm:$0xff]
        %v381 = vld [vmem:[#allocation4 + $0x30] sm:$0xff]
        %v382 = vld [vmem:[#allocation4 + $0x38] sm:$0xff]
        %v383 = vld [vmem:[#allocation4 + $0x40] sm:$0xff]
        %v384 = vld [vmem:[#allocation4 + $0x48] sm:$0xff]
        %v385 = vld [vmem:[#allocation4 + $0x50] sm:$0xff]
        %v386 = vld [vmem:[#allocation4 + $0x58] sm:$0xff]
        %v387 = vld [vmem:[#allocation4 + $0x60] sm:$0xff]
        %v388 = vld [vmem:[#allocation4 + $0x68] sm:$0xff]
        %v389 = vld [vmem:[#allocation4 + $0x70] sm:$0xff]
        %v390 = vld [vmem:[#allocation4 + $0x78] sm:$0xff]
        %v391 = vld [vmem:[#allocation4 + $0x80] sm:$0xff]
        %v392 = vld [vmem:[#allocation4 + $0x88] sm:$0xff]
        %v393 = vld [vmem:[#allocation4 + $0x90] sm:$0xff]
        %v394 = vld [vmem:[#allocation4 + $0x98] sm:$0xff]
        %v395 = vld [vmem:[#allocation4 + $0xa0] sm:$0xff]
        %v396 = vld [vmem:[#allocation4 + $0xa8] sm:$0xff]
        %v397 = vld [vmem:[#allocation4 + $0xb0] sm:$0xff]
        %v398 = vld [vmem:[#allocation4 + $0xb8] sm:$0xff]
        %v399 = vld [vmem:[#allocation4 + $0xc0] sm:$0xff]
        %v400 = vld [vmem:[#allocation4 + $0xc8] sm:$0xff]
        %v401 = vld [vmem:[#allocation4 + $0xd0] sm:$0xff]
        %v402 = vld [vmem:[#allocation4 + $0xd8] sm:$0xff]
        %v403 = vld [vmem:[#allocation4 + $0xe0] sm:$0xff]
        %v404 = vld [vmem:[#allocation4 + $0xe8] sm:$0xff]
        %v405 = vld [vmem:[#allocation4 + $0xf0] sm:$0xff]
        %v406 = vld [vmem:[#allocation4 + $0xf8] sm:$0xff]
        %v407 = vld [vmem:[#allocation4 + $0x100] sm:$0xff]
        %v408 = vld [vmem:[#allocation4 + $0x108] sm:$0xff]
        %v409 = vld [vmem:[#allocation4 + $0x110] sm:$0xff]
        %v410 = vld [vmem:[#allocation4 + $0x118] sm:$0xff]
        %v411 = vld [vmem:[#allocation4 + $0x120] sm:$0xff]
        %v412 = vld [vmem:[#allocation4 + $0x128] sm:$0xff]
        %v413 = vld [vmem:[#allocation4 + $0x130] sm:$0xff]
        %v414 = vld [vmem:[#allocation4 + $0x138] sm:$0xff]
        %v415 = vld [vmem:[#allocation4 + $0x140] sm:$0xff]
        %v416 = vld [vmem:[#allocation4 + $0x148] sm:$0xff]
        %v417 = vld [vmem:[#allocation4 + $0x150] sm:$0xff]
        %v418 = vld [vmem:[#allocation4 + $0x158] sm:$0xff]
        %v419 = vld [vmem:[#allocation4 + $0x160] sm:$0xff]
        %v420 = vld [vmem:[#allocation4 + $0x168] sm:$0xff]
        %v421 = vld [vmem:[#allocation4 + $0x170] sm:$0xff]
        %v422 = vld [vmem:[#allocation4 + $0x178] sm:$0xff]
        %v423 = vld [vmem:[#allocation4 + $0x180] sm:$0xff]
        %v424 = vld [vmem:[#allocation4 + $0x188] sm:$0xff]
        %v425 = vld [vmem:[#allocation4 + $0x190] sm:$0xff]
        %v426 = vld [vmem:[#allocation4 + $0x198] sm:$0xff]
        %v427 = vld [vmem:[#allocation4 + $0x1a0] sm:$0xff]
        %v428 = vld [vmem:[#allocation4 + $0x1a8] sm:$0xff]
        %v429 = vld [vmem:[#allocation4 + $0x1b0] sm:$0xff]
        %v430 = vld [vmem:[#allocation4 + $0x1b8] sm:$0xff]
        %v431 = vld [vmem:[#allocation4 + $0x1c0] sm:$0xff]
        %v432 = vld [vmem:[#allocation4 + $0x1c8] sm:$0xff]
        %v433 = vld [vmem:[#allocation4 + $0x1d0] sm:$0xff]
        %v434 = vld [vmem:[#allocation4 + $0x1d8] sm:$0xff]
        %v435 = vld [vmem:[#allocation4 + $0x1e0] sm:$0xff]
        %v436 = vld [vmem:[#allocation4 + $0x1e8] sm:$0xff]
        %v437 = vld [vmem:[#allocation4 + $0x1f0] sm:$0xff]
        %v438 = vld [vmem:[#allocation4 + $0x1f8] sm:$0xff]
        %v439 = vld [vmem:[#allocation4 + $0x200] sm:$0xff]
        %v440 = vld [vmem:[#allocation4 + $0x208] sm:$0xff]
        %v441 = vld [vmem:[#allocation4 + $0x210] sm:$0xff]
        %v442 = vld [vmem:[#allocation4 + $0x218] sm:$0xff]
        %v443 = vld [vmem:[#allocation4 + $0x220] sm:$0xff]
        %v444 = vld [vmem:[#allocation4 + $0x228] sm:$0xff]
        %v445 = vld [vmem:[#allocation4 + $0x230] sm:$0xff]
        %v446 = vld [vmem:[#allocation4 + $0x238] sm:$0xff]
        %v447 = vld [vmem:[#allocation4 + $0x240] sm:$0xff]
        %v448 = vld [vmem:[#allocation4 + $0x248] sm:$0xff]
        %v449 = vld [vmem:[#allocation4 + $0x250] sm:$0xff]
        %v450 = vld [vmem:[#allocation4 + $0x258] sm:$0xff]
        %v451 = vld [vmem:[#allocation4 + $0x260] sm:$0xff]
        %v452 = vld [vmem:[#allocation4 + $0x268] sm:$0xff]
        %v453 = vld [vmem:[#allocation4 + $0x270] sm:$0xff]
        %v454 = vld [vmem:[#allocation4 + $0x278] sm:$0xff]
        %v455 = vld [vmem:[#allocation4 + $0x280] sm:$0xff]
        %v456 = vld [vmem:[#allocation4 + $0x288] sm:$0xff]
        %v457 = vld [vmem:[#allocation4 + $0x290] sm:$0xff]
        %v458 = vld [vmem:[#allocation4 + $0x298] sm:$0xff]
        %v459 = vld [vmem:[#allocation4 + $0x2a0] sm:$0xff]
        %v460 = vld [vmem:[#allocation4 + $0x2a8] sm:$0xff]
        %v461 = vld [vmem:[#allocation4 + $0x2b0] sm:$0xff]
        %v462 = vld [vmem:[#allocation4 + $0x2b8] sm:$0xff]
        %v463 = vld [vmem:[#allocation4 + $0x2c0] sm:$0xff]
        %v464 = vld [vmem:[#allocation4 + $0x2c8] sm:$0xff]
        %v465 = vld [vmem:[#allocation4 + $0x2d0] sm:$0xff]
        %v466 = vld [vmem:[#allocation4 + $0x2d8] sm:$0xff]
        %v467 = vld [vmem:[#allocation4 + $0x2e0] sm:$0xff]
        %v468 = vld [vmem:[#allocation4 + $0x2e8] sm:$0xff]
        %v469 = vld [vmem:[#allocation4 + $0x2f0] sm:$0xff]
        %v470 = vld [vmem:[#allocation4 + $0x2f8] sm:$0xff]
        %s471 = scalar_lea.vmem [#allocation4], 768
        %v472 = vld [vmem:[%s471] sm:$0xff]
        %v473 = vld [vmem:[%s471 + $0x8] sm:$0xff]
        %v474 = vld [vmem:[%s471 + $0x10] sm:$0xff]
        %v475 = vld [vmem:[%s471 + $0x18] sm:$0xff]
        %v476 = vld [vmem:[%s471 + $0x20] sm:$0xff]
        %v477 = vld [vmem:[%s471 + $0x28] sm:$0xff]
        %v478 = vld [vmem:[%s471 + $0x30] sm:$0xff]
        %v479 = vld [vmem:[%s471 + $0x38] sm:$0xff]
        %v480 = vld [vmem:[%s471 + $0x40] sm:$0xff]
        %v481 = vld [vmem:[%s471 + $0x48] sm:$0xff]
        %v482 = vld [vmem:[%s471 + $0x50] sm:$0xff]
        %v483 = vld [vmem:[%s471 + $0x58] sm:$0xff]
        %v484 = vld [vmem:[%s471 + $0x60] sm:$0xff]
        %v485 = vld [vmem:[%s471 + $0x68] sm:$0xff]
        %v486 = vld [vmem:[%s471 + $0x70] sm:$0xff]
        %v487 = vld [vmem:[%s471 + $0x78] sm:$0xff]
        %v488 = vld [vmem:[%s471 + $0x80] sm:$0xff]
        %v489 = vld [vmem:[%s471 + $0x88] sm:$0xff]
        %v490 = vld [vmem:[%s471 + $0x90] sm:$0xff]
        %v491 = vld [vmem:[%s471 + $0x98] sm:$0xff]
        %v492 = vld [vmem:[%s471 + $0xa0] sm:$0xff]
        %v493 = vld [vmem:[%s471 + $0xa8] sm:$0xff]
        %v494 = vld [vmem:[%s471 + $0xb0] sm:$0xff]
        %v495 = vld [vmem:[%s471 + $0xb8] sm:$0xff]
        %v496 = vld [vmem:[%s471 + $0xc0] sm:$0xff]
        %v497 = vld [vmem:[%s471 + $0xc8] sm:$0xff]
        %v498 = vld [vmem:[%s471 + $0xd0] sm:$0xff]
        %v499 = vld [vmem:[%s471 + $0xd8] sm:$0xff]
        %v500 = vld [vmem:[%s471 + $0xe0] sm:$0xff]
        %v501 = vld [vmem:[%s471 + $0xe8] sm:$0xff]
        %v502 = vld [vmem:[%s471 + $0xf0] sm:$0xff]
        %v503 = vld [vmem:[%s471 + $0xf8] sm:$0xff]
        %v504 = vld [vmem:[%s471 + $0x100] sm:$0xff]
        %v505 = vld [vmem:[%s471 + $0x108] sm:$0xff]
        %v506 = vld [vmem:[%s471 + $0x110] sm:$0xff]
        %v507 = vld [vmem:[%s471 + $0x118] sm:$0xff]
        %v508 = vld [vmem:[%s471 + $0x120] sm:$0xff]
        %v509 = vld [vmem:[%s471 + $0x128] sm:$0xff]
        %v510 = vld [vmem:[%s471 + $0x130] sm:$0xff]
        %v511 = vld [vmem:[%s471 + $0x138] sm:$0xff]
        %v512 = vld [vmem:[%s471 + $0x140] sm:$0xff]
        %v513 = vld [vmem:[%s471 + $0x148] sm:$0xff]
        %v514 = vld [vmem:[%s471 + $0x150] sm:$0xff]
        %v515 = vld [vmem:[%s471 + $0x158] sm:$0xff]
        %v516 = vld [vmem:[%s471 + $0x160] sm:$0xff]
        %v517 = vld [vmem:[%s471 + $0x168] sm:$0xff]
        %v518 = vld [vmem:[%s471 + $0x170] sm:$0xff]
        %v519 = vld [vmem:[%s471 + $0x178] sm:$0xff]
        %v520 = vld [vmem:[%s471 + $0x180] sm:$0xff]
        %v521 = vld [vmem:[%s471 + $0x188] sm:$0xff]
        %v522 = vld [vmem:[%s471 + $0x190] sm:$0xff]
        %v523 = vld [vmem:[%s471 + $0x198] sm:$0xff]
        %v524 = vld [vmem:[%s471 + $0x1a0] sm:$0xff]
        %v525 = vld [vmem:[%s471 + $0x1a8] sm:$0xff]
        %v526 = vld [vmem:[%s471 + $0x1b0] sm:$0xff]
        %v527 = vld [vmem:[%s471 + $0x1b8] sm:$0xff]
        %v528 = vld [vmem:[%s471 + $0x1c0] sm:$0xff]
        %v529 = vld [vmem:[%s471 + $0x1c8] sm:$0xff]
        %v530 = vld [vmem:[%s471 + $0x1d0] sm:$0xff]
        %v531 = vld [vmem:[%s471 + $0x1d8] sm:$0xff]
        %v532 = vld [vmem:[%s471 + $0x1e0] sm:$0xff]
        %v533 = vld [vmem:[%s471 + $0x1e8] sm:$0xff]
        %v534 = vld [vmem:[%s471 + $0x1f0] sm:$0xff]
        %v535 = vld [vmem:[%s471 + $0x1f8] sm:$0xff]
        %v536 = vld [vmem:[%s471 + $0x200] sm:$0xff]
        %v537 = vld [vmem:[%s471 + $0x208] sm:$0xff]
        %v538 = vld [vmem:[%s471 + $0x210] sm:$0xff]
        %v539 = vld [vmem:[%s471 + $0x218] sm:$0xff]
        %v540 = vld [vmem:[%s471 + $0x220] sm:$0xff]
        %v541 = vld [vmem:[%s471 + $0x228] sm:$0xff]
        %v542 = vld [vmem:[%s471 + $0x230] sm:$0xff]
        %v543 = vld [vmem:[%s471 + $0x238] sm:$0xff]
        %v544 = vld [vmem:[%s471 + $0x240] sm:$0xff]
        %v545 = vld [vmem:[%s471 + $0x248] sm:$0xff]
        %v546 = vld [vmem:[%s471 + $0x250] sm:$0xff]
        %v547 = vld [vmem:[%s471 + $0x258] sm:$0xff]
        %v548 = vld [vmem:[%s471 + $0x260] sm:$0xff]
        %v549 = vld [vmem:[%s471 + $0x268] sm:$0xff]
        %v550 = vld [vmem:[%s471 + $0x270] sm:$0xff]
        %v551 = vld [vmem:[%s471 + $0x278] sm:$0xff]
        %v552 = vld [vmem:[%s471 + $0x280] sm:$0xff]
        %v553 = vld [vmem:[%s471 + $0x288] sm:$0xff]
        %v554 = vld [vmem:[%s471 + $0x290] sm:$0xff]
        %v555 = vld [vmem:[%s471 + $0x298] sm:$0xff]
        %v556 = vld [vmem:[%s471 + $0x2a0] sm:$0xff]
        %v557 = vld [vmem:[%s471 + $0x2a8] sm:$0xff]
        %v558 = vld [vmem:[%s471 + $0x2b0] sm:$0xff]
        %v559 = vld [vmem:[%s471 + $0x2b8] sm:$0xff]
        %v560 = vld [vmem:[%s471 + $0x2c0] sm:$0xff]
        %v561 = vld [vmem:[%s471 + $0x2c8] sm:$0xff]
        %v562 = vld [vmem:[%s471 + $0x2d0] sm:$0xff]
        %v563 = vld [vmem:[%s471 + $0x2d8] sm:$0xff]
        %v564 = vld [vmem:[%s471 + $0x2e0] sm:$0xff]
        %v565 = vld [vmem:[%s471 + $0x2e8] sm:$0xff]
        %v566 = vld [vmem:[%s471 + $0x2f0] sm:$0xff]
        %v567 = vld [vmem:[%s471 + $0x2f8] sm:$0xff]
        %vm580 = vcmask 1046528
        %v581 = vrot.slane %v363, 1
        %v582 = vrot.slane %v365, 1
        %v583 = vsel %vm580, %v581, %v582
        %v584 = vrot.slane %v364, 1
        %v585 = vrot.slane %v366, 1
        %v586 = vsel %vm580, %v584, %v585
        %v587 = vrot.slane %v367, 1
        %v588 = vsel %vm580, %v582, %v587
        %v589 = vrot.slane %v368, 1
        %v590 = vsel %vm580, %v585, %v589
        %v591 = vrot.slane %v369, 1
        %v592 = vsel %vm580, %v587, %v591
        %v593 = vrot.slane %v370, 1
        %v594 = vsel %vm580, %v589, %v593
        %v595 = vrot.slane %v371, 1
        %v596 = vsel %vm580, %v591, %v595
        %v597 = vrot.slane %v372, 1
        %v598 = vsel %vm580, %v593, %v597
        %v599 = vrot.slane %v373, 1
        %v600 = vsel %vm580, %v595, %v599
        %v601 = vrot.slane %v374, 1
        %v602 = vsel %vm580, %v597, %v601
        %613 = vmatpush.msra.mxu0 %v517
        %614 = vmatpush.msra.mxu0 %v514
        %615 = vmatpush.msra.mxu0 %v511
        %616 = vmatpush.msra.mxu0 %v508
        %617 = vmatpush.msra.mxu0 %v505
        %618 = vmatpush.msra.mxu0 %v502
        %619 = vmatpush.msra.mxu0 %v499
        %620 = vmatpush.msra.mxu0 %v496
        %621 = vmatpush.msra.mxu0 %v493
        %622 = vmatpush.msra.mxu0 %v490
        %623 = vmatpush.msra.mxu0 %v487
        %624 = vmatpush.msra.mxu0 %v484
        %625 = vmatpush.msra.mxu0 %v481
        %626 = vmatpush.msra.mxu0 %v478
        %627 = vmatpush.msra.mxu0 %v475
        %628 = vmatpush.msra.mxu0 %v472
        %629 = vmatmul.f32.gmra.mxu0 %v583
        %v630 = vpop.f32.mrf.mxu0
        %v631 = vadd.f32 0.0, %v630
        %632 = vmatmul.f32.gmra.mxu0 %v588
        %v633 = vpop.f32.mrf.mxu0
        %v634 = vadd.f32 0.0, %v633
        %635 = vmatmul.f32.gmra.mxu0 %v592
        %v636 = vpop.f32.mrf.mxu0
        %v637 = vadd.f32 0.0, %v636
        %638 = vmatmul.f32.gmra.mxu0 %v596
        %v639 = vpop.f32.mrf.mxu0
        %v640 = vadd.f32 0.0, %v639
        %641 = vmatmul.f32.gmra.mxu0 %v600
        %v642 = vpop.f32.mrf.mxu0
        %v643 = vadd.f32 0.0, %v642
        %644 = vdwg.mxu0
        %645 = vmatpush.msra.mxu0 %v565
        %646 = vmatpush.msra.mxu0 %v562
        %647 = vmatpush.msra.mxu0 %v559
        %648 = vmatpush.msra.mxu0 %v556
        %649 = vmatpush.msra.mxu0 %v553
        %650 = vmatpush.msra.mxu0 %v550
        %651 = vmatpush.msra.mxu0 %v547
        %652 = vmatpush.msra.mxu0 %v544
        %653 = vmatpush.msra.mxu0 %v541
        %654 = vmatpush.msra.mxu0 %v538
        %655 = vmatpush.msra.mxu0 %v535
        %656 = vmatpush.msra.mxu0 %v532
        %657 = vmatpush.msra.mxu0 %v529
        %658 = vmatpush.msra.mxu0 %v526
        %659 = vmatpush.msra.mxu0 %v523
        %660 = vmatpush.msra.mxu0 %v520
        %661 = vmatmul.f32.gmra.mxu0 %v586
        %v662 = vpop.f32.mrf.mxu0
        %v663 = vadd.f32 %v631, %v662
        %664 = vmatmul.f32.gmra.mxu0 %v590
        %v665 = vpop.f32.mrf.mxu0
        %v666 = vadd.f32 %v634, %v665
        %667 = vmatmul.f32.gmra.mxu0 %v594
        %v668 = vpop.f32.mrf.mxu0
        %v669 = vadd.f32 %v637, %v668
        %670 = vmatmul.f32.gmra.mxu0 %v598
        %v671 = vpop.f32.mrf.mxu0
        %v672 = vadd.f32 %v640, %v671
        %673 = vmatmul.f32.gmra.mxu0 %v602
        %v674 = vpop.f32.mrf.mxu0
        %v675 = vadd.f32 %v643, %v674
        %676 = vdwg.mxu0
        %677 = vmatpush.msra.mxu0 %v518
        %678 = vmatpush.msra.mxu0 %v515
        %679 = vmatpush.msra.mxu0 %v512
        %680 = vmatpush.msra.mxu0 %v509
        %681 = vmatpush.msra.mxu0 %v506
        %682 = vmatpush.msra.mxu0 %v503
        %683 = vmatpush.msra.mxu0 %v500
        %684 = vmatpush.msra.mxu0 %v497
        %685 = vmatpush.msra.mxu0 %v494
        %686 = vmatpush.msra.mxu0 %v491
        %687 = vmatpush.msra.mxu0 %v488
        %688 = vmatpush.msra.mxu0 %v485
        %689 = vmatpush.msra.mxu0 %v482
        %690 = vmatpush.msra.mxu0 %v479
        %691 = vmatpush.msra.mxu0 %v476
        %692 = vmatpush.msra.mxu0 %v473
        %693 = vmatmul.f32.gmra.mxu0 %v583
        %v694 = vpop.f32.mrf.mxu0
        %v695 = vadd.f32 0.0, %v694
        %696 = vmatmul.f32.gmra.mxu0 %v588
        %v697 = vpop.f32.mrf.mxu0
        %v698 = vadd.f32 0.0, %v697
        %699 = vmatmul.f32.gmra.mxu0 %v592
        %v700 = vpop.f32.mrf.mxu0
        %v701 = vadd.f32 0.0, %v700
        %702 = vmatmul.f32.gmra.mxu0 %v596
        %v703 = vpop.f32.mrf.mxu0
        %v704 = vadd.f32 0.0, %v703
        %705 = vmatmul.f32.gmra.mxu0 %v600
        %v706 = vpop.f32.mrf.mxu0
        %v707 = vadd.f32 0.0, %v706
        %708 = vdwg.mxu0
        %709 = vmatpush.msra.mxu0 %v566
        %710 = vmatpush.msra.mxu0 %v563
        %711 = vmatpush.msra.mxu0 %v560
        %712 = vmatpush.msra.mxu0 %v557
        %713 = vmatpush.msra.mxu0 %v554
        %714 = vmatpush.msra.mxu0 %v551
        %715 = vmatpush.msra.mxu0 %v548
        %716 = vmatpush.msra.mxu0 %v545
        %717 = vmatpush.msra.mxu0 %v542
        %718 = vmatpush.msra.mxu0 %v539
        %719 = vmatpush.msra.mxu0 %v536
        %720 = vmatpush.msra.mxu0 %v533
        %721 = vmatpush.msra.mxu0 %v530
        %722 = vmatpush.msra.mxu0 %v527
        %723 = vmatpush.msra.mxu0 %v524
        %724 = vmatpush.msra.mxu0 %v521
        %725 = vmatmul.f32.gmra.mxu0 %v586
        %v726 = vpop.f32.mrf.mxu0
        %v727 = vadd.f32 %v695, %v726
        %728 = vmatmul.f32.gmra.mxu0 %v590
        %v729 = vpop.f32.mrf.mxu0
        %v730 = vadd.f32 %v698, %v729
        %731 = vmatmul.f32.gmra.mxu0 %v594
        %v732 = vpop.f32.mrf.mxu0
        %v733 = vadd.f32 %v701, %v732
        %734 = vmatmul.f32.gmra.mxu0 %v598
        %v735 = vpop.f32.mrf.mxu0
        %v736 = vadd.f32 %v704, %v735
        %737 = vmatmul.f32.gmra.mxu0 %v602
        %v738 = vpop.f32.mrf.mxu0
        %v739 = vadd.f32 %v707, %v738
        %740 = vdwg.mxu0
        %741 = vmatpush.msra.mxu0 %v519
        %742 = vmatpush.msra.mxu0 %v516
        %743 = vmatpush.msra.mxu0 %v513
        %744 = vmatpush.msra.mxu0 %v510
        %745 = vmatpush.msra.mxu0 %v507
        %746 = vmatpush.msra.mxu0 %v504
        %747 = vmatpush.msra.mxu0 %v501
        %748 = vmatpush.msra.mxu0 %v498
        %749 = vmatpush.msra.mxu0 %v495
        %750 = vmatpush.msra.mxu0 %v492
        %751 = vmatpush.msra.mxu0 %v489
        %752 = vmatpush.msra.mxu0 %v486
        %753 = vmatpush.msra.mxu0 %v483
        %754 = vmatpush.msra.mxu0 %v480
        %755 = vmatpush.msra.mxu0 %v477
        %756 = vmatpush.msra.mxu0 %v474
        %757 = vmatmul.f32.gmra.mxu0 %v583
        %v758 = vpop.f32.mrf.mxu0
        %v759 = vadd.f32 0.0, %v758
        %760 = vmatmul.f32.gmra.mxu0 %v588
        %v761 = vpop.f32.mrf.mxu0
        %v762 = vadd.f32 0.0, %v761
        %763 = vmatmul.f32.gmra.mxu0 %v592
        %v764 = vpop.f32.mrf.mxu0
        %v765 = vadd.f32 0.0, %v764
        %766 = vmatmul.f32.gmra.mxu0 %v596
        %v767 = vpop.f32.mrf.mxu0
        %v768 = vadd.f32 0.0, %v767
        %769 = vmatmul.f32.gmra.mxu0 %v600
        %v770 = vpop.f32.mrf.mxu0
        %v771 = vadd.f32 0.0, %v770
        %772 = vdwg.mxu0
        %773 = vmatpush.msra.mxu0 %v567
        %774 = vmatpush.msra.mxu0 %v564
        %775 = vmatpush.msra.mxu0 %v561
        %776 = vmatpush.msra.mxu0 %v558
        %777 = vmatpush.msra.mxu0 %v555
        %778 = vmatpush.msra.mxu0 %v552
        %779 = vmatpush.msra.mxu0 %v549
        %780 = vmatpush.msra.mxu0 %v546
        %781 = vmatpush.msra.mxu0 %v543
        %782 = vmatpush.msra.mxu0 %v540
        %783 = vmatpush.msra.mxu0 %v537
        %784 = vmatpush.msra.mxu0 %v534
        %785 = vmatpush.msra.mxu0 %v531
        %786 = vmatpush.msra.mxu0 %v528
        %787 = vmatpush.msra.mxu0 %v525
        %788 = vmatpush.msra.mxu0 %v522
        %789 = vmatmul.f32.gmra.mxu0 %v586
        %v790 = vpop.f32.mrf.mxu0
        %v791 = vadd.f32 %v759, %v790
        %792 = vmatmul.f32.gmra.mxu0 %v590
        %v793 = vpop.f32.mrf.mxu0
        %v794 = vadd.f32 %v762, %v793
        %795 = vmatmul.f32.gmra.mxu0 %v594
        %v796 = vpop.f32.mrf.mxu0
        %v797 = vadd.f32 %v765, %v796
        %798 = vmatmul.f32.gmra.mxu0 %v598
        %v799 = vpop.f32.mrf.mxu0
        %v800 = vadd.f32 %v768, %v799
        %801 = vmatmul.f32.gmra.mxu0 %v602
        %v802 = vpop.f32.mrf.mxu0
        %v803 = vadd.f32 %v771, %v802
        %804 = vdwg.mxu0
        %805 = vmatpush.msra.mxu0 %v420
        %806 = vmatpush.msra.mxu0 %v417
        %807 = vmatpush.msra.mxu0 %v414
        %808 = vmatpush.msra.mxu0 %v411
        %809 = vmatpush.msra.mxu0 %v408
        %810 = vmatpush.msra.mxu0 %v405
        %811 = vmatpush.msra.mxu0 %v402
        %812 = vmatpush.msra.mxu0 %v399
        %813 = vmatpush.msra.mxu0 %v396
        %814 = vmatpush.msra.mxu0 %v393
        %815 = vmatpush.msra.mxu0 %v390
        %816 = vmatpush.msra.mxu0 %v387
        %817 = vmatpush.msra.mxu0 %v384
        %818 = vmatpush.msra.mxu0 %v381
        %819 = vmatpush.msra.mxu0 %v378
        %820 = vmatpush.msra.mxu0 %v375
        %821 = vmatmul.f32.gmra.mxu0 %v363
        %v822 = vpop.f32.mrf.mxu0
        %v823 = vadd.f32 %v663, %v822
        %824 = vmatmul.f32.gmra.mxu0 %v365
        %v825 = vpop.f32.mrf.mxu0
        %v826 = vadd.f32 %v666, %v825
        %827 = vmatmul.f32.gmra.mxu0 %v367
        %v828 = vpop.f32.mrf.mxu0
        %v829 = vadd.f32 %v669, %v828
        %830 = vmatmul.f32.gmra.mxu0 %v369
        %v831 = vpop.f32.mrf.mxu0
        %v832 = vadd.f32 %v672, %v831
        %833 = vmatmul.f32.gmra.mxu0 %v371
        %v834 = vpop.f32.mrf.mxu0
        %v835 = vadd.f32 %v675, %v834
        %836 = vdwg.mxu0
        %837 = vmatpush.msra.mxu0 %v468
        %838 = vmatpush.msra.mxu0 %v465
        %839 = vmatpush.msra.mxu0 %v462
        %840 = vmatpush.msra.mxu0 %v459
        %841 = vmatpush.msra.mxu0 %v456
        %842 = vmatpush.msra.mxu0 %v453
        %843 = vmatpush.msra.mxu0 %v450
        %844 = vmatpush.msra.mxu0 %v447
        %845 = vmatpush.msra.mxu0 %v444
        %846 = vmatpush.msra.mxu0 %v441
        %847 = vmatpush.msra.mxu0 %v438
        %848 = vmatpush.msra.mxu0 %v435
        %849 = vmatpush.msra.mxu0 %v432
        %850 = vmatpush.msra.mxu0 %v429
        %851 = vmatpush.msra.mxu0 %v426
        %852 = vmatpush.msra.mxu0 %v423
        %853 = vmatmul.f32.gmra.mxu0 %v364
        %v854 = vpop.f32.mrf.mxu0
        %v855 = vadd.f32 %v823, %v854
        %856 = vmatmul.f32.gmra.mxu0 %v366
        %v857 = vpop.f32.mrf.mxu0
        %v858 = vadd.f32 %v826, %v857
        %859 = vmatmul.f32.gmra.mxu0 %v368
        %v860 = vpop.f32.mrf.mxu0
        %v861 = vadd.f32 %v829, %v860
        %862 = vmatmul.f32.gmra.mxu0 %v370
        %v863 = vpop.f32.mrf.mxu0
        %v864 = vadd.f32 %v832, %v863
        %865 = vmatmul.f32.gmra.mxu0 %v372
        %v866 = vpop.f32.mrf.mxu0
        %v867 = vadd.f32 %v835, %v866
        %868 = vdwg.mxu0
        %869 = vmatpush.msra.mxu0 %v421
        %870 = vmatpush.msra.mxu0 %v418
        %871 = vmatpush.msra.mxu0 %v415
        %872 = vmatpush.msra.mxu0 %v412
        %873 = vmatpush.msra.mxu0 %v409
        %874 = vmatpush.msra.mxu0 %v406
        %875 = vmatpush.msra.mxu0 %v403
        %876 = vmatpush.msra.mxu0 %v400
        %877 = vmatpush.msra.mxu0 %v397
        %878 = vmatpush.msra.mxu0 %v394
        %879 = vmatpush.msra.mxu0 %v391
        %880 = vmatpush.msra.mxu0 %v388
        %881 = vmatpush.msra.mxu0 %v385
        %882 = vmatpush.msra.mxu0 %v382
        %883 = vmatpush.msra.mxu0 %v379
        %884 = vmatpush.msra.mxu0 %v376
        %885 = vmatmul.f32.gmra.mxu0 %v363
        %v886 = vpop.f32.mrf.mxu0
        %v887 = vadd.f32 %v727, %v886
        %888 = vmatmul.f32.gmra.mxu0 %v365
        %v889 = vpop.f32.mrf.mxu0
        %v890 = vadd.f32 %v730, %v889
        %891 = vmatmul.f32.gmra.mxu0 %v367
        %v892 = vpop.f32.mrf.mxu0
        %v893 = vadd.f32 %v733, %v892
        %894 = vmatmul.f32.gmra.mxu0 %v369
        %v895 = vpop.f32.mrf.mxu0
        %v896 = vadd.f32 %v736, %v895
        %897 = vmatmul.f32.gmra.mxu0 %v371
        %v898 = vpop.f32.mrf.mxu0
        %v899 = vadd.f32 %v739, %v898
        %900 = vdwg.mxu0
        %901 = vmatpush.msra.mxu0 %v469
        %902 = vmatpush.msra.mxu0 %v466
        %903 = vmatpush.msra.mxu0 %v463
        %904 = vmatpush.msra.mxu0 %v460
        %905 = vmatpush.msra.mxu0 %v457
        %906 = vmatpush.msra.mxu0 %v454
        %907 = vmatpush.msra.mxu0 %v451
        %908 = vmatpush.msra.mxu0 %v448
        %909 = vmatpush.msra.mxu0 %v445
        %910 = vmatpush.msra.mxu0 %v442
        %911 = vmatpush.msra.mxu0 %v439
        %912 = vmatpush.msra.mxu0 %v436
        %913 = vmatpush.msra.mxu0 %v433
        %914 = vmatpush.msra.mxu0 %v430
        %915 = vmatpush.msra.mxu0 %v427
        %916 = vmatpush.msra.mxu0 %v424
        %917 = vmatmul.f32.gmra.mxu0 %v364
        %v918 = vpop.f32.mrf.mxu0
        %v919 = vadd.f32 %v887, %v918
        %920 = vmatmul.f32.gmra.mxu0 %v366
        %v921 = vpop.f32.mrf.mxu0
        %v922 = vadd.f32 %v890, %v921
        %923 = vmatmul.f32.gmra.mxu0 %v368
        %v924 = vpop.f32.mrf.mxu0
        %v925 = vadd.f32 %v893, %v924
        %926 = vmatmul.f32.gmra.mxu0 %v370
        %v927 = vpop.f32.mrf.mxu0
        %v928 = vadd.f32 %v896, %v927
        %929 = vmatmul.f32.gmra.mxu0 %v372
        %v930 = vpop.f32.mrf.mxu0
        %v931 = vadd.f32 %v899, %v930
        %932 = vdwg.mxu0
        %933 = vmatpush.msra.mxu0 %v422
        %934 = vmatpush.msra.mxu0 %v419
        %935 = vmatpush.msra.mxu0 %v416
        %936 = vmatpush.msra.mxu0 %v413
        %937 = vmatpush.msra.mxu0 %v410
        %938 = vmatpush.msra.mxu0 %v407
        %939 = vmatpush.msra.mxu0 %v404
        %940 = vmatpush.msra.mxu0 %v401
        %941 = vmatpush.msra.mxu0 %v398
        %942 = vmatpush.msra.mxu0 %v395
        %943 = vmatpush.msra.mxu0 %v392
        %944 = vmatpush.msra.mxu0 %v389
        %945 = vmatpush.msra.mxu0 %v386
        %946 = vmatpush.msra.mxu0 %v383
        %947 = vmatpush.msra.mxu0 %v380
        %948 = vmatpush.msra.mxu0 %v377
        %949 = vmatmul.f32.gmra.mxu0 %v363
        %v950 = vpop.f32.mrf.mxu0
        %v951 = vadd.f32 %v791, %v950
        %952 = vmatmul.f32.gmra.mxu0 %v365
        %v953 = vpop.f32.mrf.mxu0
        %v954 = vadd.f32 %v794, %v953
        %955 = vmatmul.f32.gmra.mxu0 %v367
        %v956 = vpop.f32.mrf.mxu0
        %v957 = vadd.f32 %v797, %v956
        %958 = vmatmul.f32.gmra.mxu0 %v369
        %v959 = vpop.f32.mrf.mxu0
        %v960 = vadd.f32 %v800, %v959
        %961 = vmatmul.f32.gmra.mxu0 %v371
        %v962 = vpop.f32.mrf.mxu0
        %v963 = vadd.f32 %v803, %v962
        %964 = vdwg.mxu0
        %965 = vmatpush.msra.mxu0 %v470
        %966 = vmatpush.msra.mxu0 %v467
        %967 = vmatpush.msra.mxu0 %v464
        %968 = vmatpush.msra.mxu0 %v461
        %969 = vmatpush.msra.mxu0 %v458
        %970 = vmatpush.msra.mxu0 %v455
        %971 = vmatpush.msra.mxu0 %v452
        %972 = vmatpush.msra.mxu0 %v449
        %973 = vmatpush.msra.mxu0 %v446
        %974 = vmatpush.msra.mxu0 %v443
        %975 = vmatpush.msra.mxu0 %v440
        %976 = vmatpush.msra.mxu0 %v437
        %977 = vmatpush.msra.mxu0 %v434
        %978 = vmatpush.msra.mxu0 %v431
        %979 = vmatpush.msra.mxu0 %v428
        %980 = vmatpush.msra.mxu0 %v425
        %981 = vmatmul.f32.gmra.mxu0 %v364
        %v982 = vpop.f32.mrf.mxu0
        %v983 = vadd.f32 %v951, %v982
        %984 = vmatmul.f32.gmra.mxu0 %v366
        %v985 = vpop.f32.mrf.mxu0
        %v986 = vadd.f32 %v954, %v985
        %987 = vmatmul.f32.gmra.mxu0 %v368
        %v988 = vpop.f32.mrf.mxu0
        %v989 = vadd.f32 %v957, %v988
        %990 = vmatmul.f32.gmra.mxu0 %v370
        %v991 = vpop.f32.mrf.mxu0
        %v992 = vadd.f32 %v960, %v991
        %993 = vmatmul.f32.gmra.mxu0 %v372
        %v994 = vpop.f32.mrf.mxu0
        %v995 = vadd.f32 %v963, %v994
        %996 = vdwg.mxu0
        %s997 = scalar_lea.vmem [#allocation4], 1536
        %v998 = vld [vmem:[%s997] sm:$0xff]
        %v999 = vld [vmem:[%s997 + $0x8] sm:$0xff]
        %v1000 = vld [vmem:[%s997 + $0x10] sm:$0xff]
        %v1001 = vld [vmem:[%s997 + $0x18] sm:$0xff]
        %v1002 = vld [vmem:[%s997 + $0x20] sm:$0xff]
        %v1003 = vld [vmem:[%s997 + $0x28] sm:$0xff]
        %v1004 = vld [vmem:[%s997 + $0x30] sm:$0xff]
        %v1005 = vld [vmem:[%s997 + $0x38] sm:$0xff]
        %v1006 = vld [vmem:[%s997 + $0x40] sm:$0xff]
        %v1007 = vld [vmem:[%s997 + $0x48] sm:$0xff]
        %v1008 = vld [vmem:[%s997 + $0x50] sm:$0xff]
        %v1009 = vld [vmem:[%s997 + $0x58] sm:$0xff]
        %v1010 = vld [vmem:[%s997 + $0x60] sm:$0xff]
        %v1011 = vld [vmem:[%s997 + $0x68] sm:$0xff]
        %v1012 = vld [vmem:[%s997 + $0x70] sm:$0xff]
        %v1013 = vld [vmem:[%s997 + $0x78] sm:$0xff]
        %v1014 = vld [vmem:[%s997 + $0x80] sm:$0xff]
        %v1015 = vld [vmem:[%s997 + $0x88] sm:$0xff]
        %v1016 = vld [vmem:[%s997 + $0x90] sm:$0xff]
        %v1017 = vld [vmem:[%s997 + $0x98] sm:$0xff]
        %v1018 = vld [vmem:[%s997 + $0xa0] sm:$0xff]
        %v1019 = vld [vmem:[%s997 + $0xa8] sm:$0xff]
        %v1020 = vld [vmem:[%s997 + $0xb0] sm:$0xff]
        %v1021 = vld [vmem:[%s997 + $0xb8] sm:$0xff]
        %v1022 = vld [vmem:[%s997 + $0xc0] sm:$0xff]
        %v1023 = vld [vmem:[%s997 + $0xc8] sm:$0xff]
        %v1024 = vld [vmem:[%s997 + $0xd0] sm:$0xff]
        %v1025 = vld [vmem:[%s997 + $0xd8] sm:$0xff]
        %v1026 = vld [vmem:[%s997 + $0xe0] sm:$0xff]
        %v1027 = vld [vmem:[%s997 + $0xe8] sm:$0xff]
        %v1028 = vld [vmem:[%s997 + $0xf0] sm:$0xff]
        %v1029 = vld [vmem:[%s997 + $0xf8] sm:$0xff]
        %v1030 = vld [vmem:[%s997 + $0x100] sm:$0xff]
        %v1031 = vld [vmem:[%s997 + $0x108] sm:$0xff]
        %v1032 = vld [vmem:[%s997 + $0x110] sm:$0xff]
        %v1033 = vld [vmem:[%s997 + $0x118] sm:$0xff]
        %v1034 = vld [vmem:[%s997 + $0x120] sm:$0xff]
        %v1035 = vld [vmem:[%s997 + $0x128] sm:$0xff]
        %v1036 = vld [vmem:[%s997 + $0x130] sm:$0xff]
        %v1037 = vld [vmem:[%s997 + $0x138] sm:$0xff]
        %v1038 = vld [vmem:[%s997 + $0x140] sm:$0xff]
        %v1039 = vld [vmem:[%s997 + $0x148] sm:$0xff]
        %v1040 = vld [vmem:[%s997 + $0x150] sm:$0xff]
        %v1041 = vld [vmem:[%s997 + $0x158] sm:$0xff]
        %v1042 = vld [vmem:[%s997 + $0x160] sm:$0xff]
        %v1043 = vld [vmem:[%s997 + $0x168] sm:$0xff]
        %v1044 = vld [vmem:[%s997 + $0x170] sm:$0xff]
        %v1045 = vld [vmem:[%s997 + $0x178] sm:$0xff]
        %v1046 = vld [vmem:[%s997 + $0x180] sm:$0xff]
        %v1047 = vld [vmem:[%s997 + $0x188] sm:$0xff]
        %v1048 = vld [vmem:[%s997 + $0x190] sm:$0xff]
        %v1049 = vld [vmem:[%s997 + $0x198] sm:$0xff]
        %v1050 = vld [vmem:[%s997 + $0x1a0] sm:$0xff]
        %v1051 = vld [vmem:[%s997 + $0x1a8] sm:$0xff]
        %v1052 = vld [vmem:[%s997 + $0x1b0] sm:$0xff]
        %v1053 = vld [vmem:[%s997 + $0x1b8] sm:$0xff]
        %v1054 = vld [vmem:[%s997 + $0x1c0] sm:$0xff]
        %v1055 = vld [vmem:[%s997 + $0x1c8] sm:$0xff]
        %v1056 = vld [vmem:[%s997 + $0x1d0] sm:$0xff]
        %v1057 = vld [vmem:[%s997 + $0x1d8] sm:$0xff]
        %v1058 = vld [vmem:[%s997 + $0x1e0] sm:$0xff]
        %v1059 = vld [vmem:[%s997 + $0x1e8] sm:$0xff]
        %v1060 = vld [vmem:[%s997 + $0x1f0] sm:$0xff]
        %v1061 = vld [vmem:[%s997 + $0x1f8] sm:$0xff]
        %v1062 = vld [vmem:[%s997 + $0x200] sm:$0xff]
        %v1063 = vld [vmem:[%s997 + $0x208] sm:$0xff]
        %v1064 = vld [vmem:[%s997 + $0x210] sm:$0xff]
        %v1065 = vld [vmem:[%s997 + $0x218] sm:$0xff]
        %v1066 = vld [vmem:[%s997 + $0x220] sm:$0xff]
        %v1067 = vld [vmem:[%s997 + $0x228] sm:$0xff]
        %v1068 = vld [vmem:[%s997 + $0x230] sm:$0xff]
        %v1069 = vld [vmem:[%s997 + $0x238] sm:$0xff]
        %v1070 = vld [vmem:[%s997 + $0x240] sm:$0xff]
        %v1071 = vld [vmem:[%s997 + $0x248] sm:$0xff]
        %v1072 = vld [vmem:[%s997 + $0x250] sm:$0xff]
        %v1073 = vld [vmem:[%s997 + $0x258] sm:$0xff]
        %v1074 = vld [vmem:[%s997 + $0x260] sm:$0xff]
        %v1075 = vld [vmem:[%s997 + $0x268] sm:$0xff]
        %v1076 = vld [vmem:[%s997 + $0x270] sm:$0xff]
        %v1077 = vld [vmem:[%s997 + $0x278] sm:$0xff]
        %v1078 = vld [vmem:[%s997 + $0x280] sm:$0xff]
        %v1079 = vld [vmem:[%s997 + $0x288] sm:$0xff]
        %v1080 = vld [vmem:[%s997 + $0x290] sm:$0xff]
        %v1081 = vld [vmem:[%s997 + $0x298] sm:$0xff]
        %v1082 = vld [vmem:[%s997 + $0x2a0] sm:$0xff]
        %v1083 = vld [vmem:[%s997 + $0x2a8] sm:$0xff]
        %v1084 = vld [vmem:[%s997 + $0x2b0] sm:$0xff]
        %v1085 = vld [vmem:[%s997 + $0x2b8] sm:$0xff]
        %v1086 = vld [vmem:[%s997 + $0x2c0] sm:$0xff]
        %v1087 = vld [vmem:[%s997 + $0x2c8] sm:$0xff]
        %v1088 = vld [vmem:[%s997 + $0x2d0] sm:$0xff]
        %v1089 = vld [vmem:[%s997 + $0x2d8] sm:$0xff]
        %v1090 = vld [vmem:[%s997 + $0x2e0] sm:$0xff]
        %v1091 = vld [vmem:[%s997 + $0x2e8] sm:$0xff]
        %v1092 = vld [vmem:[%s997 + $0x2f0] sm:$0xff]
        %v1093 = vld [vmem:[%s997 + $0x2f8] sm:$0xff]
        %vm1094 = vcmask 1045504
        %v1095 = vrot.slane %v363, 2
        %v1096 = vrot.slane %v365, 2
        %v1097 = vsel %vm1094, %v1095, %v1096
        %v1098 = vrot.slane %v364, 2
        %v1099 = vrot.slane %v366, 2
        %v1100 = vsel %vm1094, %v1098, %v1099
        %v1101 = vrot.slane %v367, 2
        %v1102 = vsel %vm1094, %v1096, %v1101
        %v1103 = vrot.slane %v368, 2
        %v1104 = vsel %vm1094, %v1099, %v1103
        %v1105 = vrot.slane %v369, 2
        %v1106 = vsel %vm1094, %v1101, %v1105
        %v1107 = vrot.slane %v370, 2
        %v1108 = vsel %vm1094, %v1103, %v1107
        %v1109 = vrot.slane %v371, 2
        %v1110 = vsel %vm1094, %v1105, %v1109
        %v1111 = vrot.slane %v372, 2
        %v1112 = vsel %vm1094, %v1107, %v1111
        %v1113 = vrot.slane %v373, 2
        %v1114 = vsel %vm1094, %v1109, %v1113
        %v1115 = vrot.slane %v374, 2
        %v1116 = vsel %vm1094, %v1111, %v1115
        %1127 = vmatpush.msra.mxu0 %v1043
        %1128 = vmatpush.msra.mxu0 %v1040
        %1129 = vmatpush.msra.mxu0 %v1037
        %1130 = vmatpush.msra.mxu0 %v1034
        %1131 = vmatpush.msra.mxu0 %v1031
        %1132 = vmatpush.msra.mxu0 %v1028
        %1133 = vmatpush.msra.mxu0 %v1025
        %1134 = vmatpush.msra.mxu0 %v1022
        %1135 = vmatpush.msra.mxu0 %v1019
        %1136 = vmatpush.msra.mxu0 %v1016
        %1137 = vmatpush.msra.mxu0 %v1013
        %1138 = vmatpush.msra.mxu0 %v1010
        %1139 = vmatpush.msra.mxu0 %v1007
        %1140 = vmatpush.msra.mxu0 %v1004
        %1141 = vmatpush.msra.mxu0 %v1001
        %1142 = vmatpush.msra.mxu0 %v998
        %1143 = vmatmul.f32.gmra.mxu0 %v1097
        %v1144 = vpop.f32.mrf.mxu0
        %v1145 = vadd.f32 0.0, %v1144
        %1146 = vmatmul.f32.gmra.mxu0 %v1102
        %v1147 = vpop.f32.mrf.mxu0
        %v1148 = vadd.f32 0.0, %v1147
        %1149 = vmatmul.f32.gmra.mxu0 %v1106
        %v1150 = vpop.f32.mrf.mxu0
        %v1151 = vadd.f32 0.0, %v1150
        %1152 = vmatmul.f32.gmra.mxu0 %v1110
        %v1153 = vpop.f32.mrf.mxu0
        %v1154 = vadd.f32 0.0, %v1153
        %1155 = vmatmul.f32.gmra.mxu0 %v1114
        %v1156 = vpop.f32.mrf.mxu0
        %v1157 = vadd.f32 0.0, %v1156
        %1158 = vdwg.mxu0
        %1159 = vmatpush.msra.mxu0 %v1091
        %1160 = vmatpush.msra.mxu0 %v1088
        %1161 = vmatpush.msra.mxu0 %v1085
        %1162 = vmatpush.msra.mxu0 %v1082
        %1163 = vmatpush.msra.mxu0 %v1079
        %1164 = vmatpush.msra.mxu0 %v1076
        %1165 = vmatpush.msra.mxu0 %v1073
        %1166 = vmatpush.msra.mxu0 %v1070
        %1167 = vmatpush.msra.mxu0 %v1067
        %1168 = vmatpush.msra.mxu0 %v1064
        %1169 = vmatpush.msra.mxu0 %v1061
        %1170 = vmatpush.msra.mxu0 %v1058
        %1171 = vmatpush.msra.mxu0 %v1055
        %1172 = vmatpush.msra.mxu0 %v1052
        %1173 = vmatpush.msra.mxu0 %v1049
        %1174 = vmatpush.msra.mxu0 %v1046
        %1175 = vmatmul.f32.gmra.mxu0 %v1100
        %v1176 = vpop.f32.mrf.mxu0
        %v1177 = vadd.f32 %v1145, %v1176
        %1178 = vmatmul.f32.gmra.mxu0 %v1104
        %v1179 = vpop.f32.mrf.mxu0
        %v1180 = vadd.f32 %v1148, %v1179
        %1181 = vmatmul.f32.gmra.mxu0 %v1108
        %v1182 = vpop.f32.mrf.mxu0
        %v1183 = vadd.f32 %v1151, %v1182
        %1184 = vmatmul.f32.gmra.mxu0 %v1112
        %v1185 = vpop.f32.mrf.mxu0
        %v1186 = vadd.f32 %v1154, %v1185
        %1187 = vmatmul.f32.gmra.mxu0 %v1116
        %v1188 = vpop.f32.mrf.mxu0
        %v1189 = vadd.f32 %v1157, %v1188
        %1190 = vdwg.mxu0
        %1191 = vmatpush.msra.mxu0 %v1044
        %1192 = vmatpush.msra.mxu0 %v1041
        %1193 = vmatpush.msra.mxu0 %v1038
        %1194 = vmatpush.msra.mxu0 %v1035
        %1195 = vmatpush.msra.mxu0 %v1032
        %1196 = vmatpush.msra.mxu0 %v1029
        %1197 = vmatpush.msra.mxu0 %v1026
        %1198 = vmatpush.msra.mxu0 %v1023
        %1199 = vmatpush.msra.mxu0 %v1020
        %1200 = vmatpush.msra.mxu0 %v1017
        %1201 = vmatpush.msra.mxu0 %v1014
        %1202 = vmatpush.msra.mxu0 %v1011
        %1203 = vmatpush.msra.mxu0 %v1008
        %1204 = vmatpush.msra.mxu0 %v1005
        %1205 = vmatpush.msra.mxu0 %v1002
        %1206 = vmatpush.msra.mxu0 %v999
        %1207 = vmatmul.f32.gmra.mxu0 %v1097
        %v1208 = vpop.f32.mrf.mxu0
        %v1209 = vadd.f32 0.0, %v1208
        %1210 = vmatmul.f32.gmra.mxu0 %v1102
        %v1211 = vpop.f32.mrf.mxu0
        %v1212 = vadd.f32 0.0, %v1211
        %1213 = vmatmul.f32.gmra.mxu0 %v1106
        %v1214 = vpop.f32.mrf.mxu0
        %v1215 = vadd.f32 0.0, %v1214
        %1216 = vmatmul.f32.gmra.mxu0 %v1110
        %v1217 = vpop.f32.mrf.mxu0
        %v1218 = vadd.f32 0.0, %v1217
        %1219 = vmatmul.f32.gmra.mxu0 %v1114
        %v1220 = vpop.f32.mrf.mxu0
        %v1221 = vadd.f32 0.0, %v1220
        %1222 = vdwg.mxu0
        %1223 = vmatpush.msra.mxu0 %v1092
        %1224 = vmatpush.msra.mxu0 %v1089
        %1225 = vmatpush.msra.mxu0 %v1086
        %1226 = vmatpush.msra.mxu0 %v1083
        %1227 = vmatpush.msra.mxu0 %v1080
        %1228 = vmatpush.msra.mxu0 %v1077
        %1229 = vmatpush.msra.mxu0 %v1074
        %1230 = vmatpush.msra.mxu0 %v1071
        %1231 = vmatpush.msra.mxu0 %v1068
        %1232 = vmatpush.msra.mxu0 %v1065
        %1233 = vmatpush.msra.mxu0 %v1062
        %1234 = vmatpush.msra.mxu0 %v1059
        %1235 = vmatpush.msra.mxu0 %v1056
        %1236 = vmatpush.msra.mxu0 %v1053
        %1237 = vmatpush.msra.mxu0 %v1050
        %1238 = vmatpush.msra.mxu0 %v1047
        %1239 = vmatmul.f32.gmra.mxu0 %v1100
        %v1240 = vpop.f32.mrf.mxu0
        %v1241 = vadd.f32 %v1209, %v1240
        %1242 = vmatmul.f32.gmra.mxu0 %v1104
        %v1243 = vpop.f32.mrf.mxu0
        %v1244 = vadd.f32 %v1212, %v1243
        %1245 = vmatmul.f32.gmra.mxu0 %v1108
        %v1246 = vpop.f32.mrf.mxu0
        %v1247 = vadd.f32 %v1215, %v1246
        %1248 = vmatmul.f32.gmra.mxu0 %v1112
        %v1249 = vpop.f32.mrf.mxu0
        %v1250 = vadd.f32 %v1218, %v1249
        %1251 = vmatmul.f32.gmra.mxu0 %v1116
        %v1252 = vpop.f32.mrf.mxu0
        %v1253 = vadd.f32 %v1221, %v1252
        %1254 = vdwg.mxu0
        %1255 = vmatpush.msra.mxu0 %v1045
        %1256 = vmatpush.msra.mxu0 %v1042
        %1257 = vmatpush.msra.mxu0 %v1039
        %1258 = vmatpush.msra.mxu0 %v1036
        %1259 = vmatpush.msra.mxu0 %v1033
        %1260 = vmatpush.msra.mxu0 %v1030
        %1261 = vmatpush.msra.mxu0 %v1027
        %1262 = vmatpush.msra.mxu0 %v1024
        %1263 = vmatpush.msra.mxu0 %v1021
        %1264 = vmatpush.msra.mxu0 %v1018
        %1265 = vmatpush.msra.mxu0 %v1015
        %1266 = vmatpush.msra.mxu0 %v1012
        %1267 = vmatpush.msra.mxu0 %v1009
        %1268 = vmatpush.msra.mxu0 %v1006
        %1269 = vmatpush.msra.mxu0 %v1003
        %1270 = vmatpush.msra.mxu0 %v1000
        %1271 = vmatmul.f32.gmra.mxu0 %v1097
        %v1272 = vpop.f32.mrf.mxu0
        %v1273 = vadd.f32 0.0, %v1272
        %1274 = vmatmul.f32.gmra.mxu0 %v1102
        %v1275 = vpop.f32.mrf.mxu0
        %v1276 = vadd.f32 0.0, %v1275
        %1277 = vmatmul.f32.gmra.mxu0 %v1106
        %v1278 = vpop.f32.mrf.mxu0
        %v1279 = vadd.f32 0.0, %v1278
        %1280 = vmatmul.f32.gmra.mxu0 %v1110
        %v1281 = vpop.f32.mrf.mxu0
        %v1282 = vadd.f32 0.0, %v1281
        %1283 = vmatmul.f32.gmra.mxu0 %v1114
        %v1284 = vpop.f32.mrf.mxu0
        %v1285 = vadd.f32 0.0, %v1284
        %1286 = vdwg.mxu0
        %1287 = vmatpush.msra.mxu0 %v1093
        %1288 = vmatpush.msra.mxu0 %v1090
        %1289 = vmatpush.msra.mxu0 %v1087
        %1290 = vmatpush.msra.mxu0 %v1084
        %1291 = vmatpush.msra.mxu0 %v1081
        %1292 = vmatpush.msra.mxu0 %v1078
        %1293 = vmatpush.msra.mxu0 %v1075
        %1294 = vmatpush.msra.mxu0 %v1072
        %1295 = vmatpush.msra.mxu0 %v1069
        %1296 = vmatpush.msra.mxu0 %v1066
        %1297 = vmatpush.msra.mxu0 %v1063
        %1298 = vmatpush.msra.mxu0 %v1060
        %1299 = vmatpush.msra.mxu0 %v1057
        %1300 = vmatpush.msra.mxu0 %v1054
        %1301 = vmatpush.msra.mxu0 %v1051
        %1302 = vmatpush.msra.mxu0 %v1048
        %1303 = vmatmul.f32.gmra.mxu0 %v1100
        %v1304 = vpop.f32.mrf.mxu0
        %v1305 = vadd.f32 %v1273, %v1304
        %1306 = vmatmul.f32.gmra.mxu0 %v1104
        %v1307 = vpop.f32.mrf.mxu0
        %v1308 = vadd.f32 %v1276, %v1307
        %1309 = vmatmul.f32.gmra.mxu0 %v1108
        %v1310 = vpop.f32.mrf.mxu0
        %v1311 = vadd.f32 %v1279, %v1310
        %1312 = vmatmul.f32.gmra.mxu0 %v1112
        %v1313 = vpop.f32.mrf.mxu0
        %v1314 = vadd.f32 %v1282, %v1313
        %1315 = vmatmul.f32.gmra.mxu0 %v1116
        %v1316 = vpop.f32.mrf.mxu0
        %v1317 = vadd.f32 %v1285, %v1316
        %1318 = vdwg.mxu0
        %v1319 = vadd.f32 %v855, %v1177
        %v1320 = vadd.f32 %v919, %v1241
        %v1321 = vadd.f32 %v983, %v1305
        %v1322 = vadd.f32 %v858, %v1180
        %v1323 = vadd.f32 %v922, %v1244
        %v1324 = vadd.f32 %v986, %v1308
        %v1325 = vadd.f32 %v861, %v1183
        %v1326 = vadd.f32 %v925, %v1247
        %v1327 = vadd.f32 %v989, %v1311
        %v1328 = vadd.f32 %v864, %v1186
        %v1329 = vadd.f32 %v928, %v1250
        %v1330 = vadd.f32 %v992, %v1314
        %v1331 = vadd.f32 %v867, %v1189
        %v1332 = vadd.f32 %v931, %v1253
        %v1333 = vadd.f32 %v995, %v1317
        %v1334 = vld [vmem:[%s3] sm:$0xff]
        %v1335 = vld [vmem:[%s3 + $0x8] sm:$0xff]
        %v1336 = vld [vmem:[%s3 + $0x10] sm:$0xff]
        %v1337 = vld [vmem:[%s3 + $0x18] sm:$0xff]
        %v1338 = vld [vmem:[%s3 + $0x20] sm:$0xff]
        %v1339 = vld [vmem:[%s3 + $0x28] sm:$0xff]
        %v1340 = vld [vmem:[%s3 + $0x30] sm:$0xff]
        %v1341 = vld [vmem:[%s3 + $0x38] sm:$0xff]
        %v1342 = vld [vmem:[%s3 + $0x40] sm:$0xff]
        %v1343 = vld [vmem:[%s3 + $0x48] sm:$0xff]
        %v1344 = vld [vmem:[%s3 + $0x50] sm:$0xff]
        %v1345 = vld [vmem:[%s3 + $0x58] sm:$0xff]
        %v1346 = vld [vmem:[%s3 + $0x60] sm:$0xff]
        %v1347 = vld [vmem:[%s3 + $0x68] sm:$0xff]
        %v1348 = vld [vmem:[%s3 + $0x70] sm:$0xff]
        %v1349 = vmul.f32 %v1319, %v1334
        %v1350 = vmul.f32 %v1320, %v1335
        %v1351 = vmul.f32 %v1321, %v1336
        %v1352 = vmul.f32 %v1322, %v1337
        %v1353 = vmul.f32 %v1323, %v1338
        %v1354 = vmul.f32 %v1324, %v1339
        %v1355 = vmul.f32 %v1325, %v1340
        %v1356 = vmul.f32 %v1326, %v1341
        %v1357 = vmul.f32 %v1327, %v1342
        %v1358 = vmul.f32 %v1328, %v1343
        %v1359 = vmul.f32 %v1329, %v1344
        %v1360 = vmul.f32 %v1330, %v1345
        %v1361 = vmul.f32 %v1331, %v1346
        %v1362 = vmul.f32 %v1332, %v1347
        %v1363 = vmul.f32 %v1333, %v1348
        %s1364 = scalar_lea.vmem %s3, 120
        %v1365 = vld [vmem:[%s1364] sm:$0xff]
        %v1366 = vld [vmem:[%s1364 + $0x8] sm:$0xff]
        %v1367 = vld [vmem:[%s1364 + $0x10] sm:$0xff]
        %v1368 = vld [vmem:[%s1364 + $0x18] sm:$0xff]
        %v1369 = vld [vmem:[%s1364 + $0x20] sm:$0xff]
        %v1370 = vld [vmem:[%s1364 + $0x28] sm:$0xff]
        %v1371 = vld [vmem:[%s1364 + $0x30] sm:$0xff]
        %v1372 = vld [vmem:[%s1364 + $0x38] sm:$0xff]
        %v1373 = vld [vmem:[%s1364 + $0x40] sm:$0xff]
        %v1374 = vld [vmem:[%s1364 + $0x48] sm:$0xff]
        %v1375 = vld [vmem:[%s1364 + $0x50] sm:$0xff]
        %v1376 = vld [vmem:[%s1364 + $0x58] sm:$0xff]
        %v1377 = vld [vmem:[%s1364 + $0x60] sm:$0xff]
        %v1378 = vld [vmem:[%s1364 + $0x68] sm:$0xff]
        %v1379 = vld [vmem:[%s1364 + $0x70] sm:$0xff]
        %v1380 = vadd.f32 %v1349, %v1365
        %v1381 = vadd.f32 %v1350, %v1366
        %v1382 = vadd.f32 %v1351, %v1367
        %v1383 = vadd.f32 %v1352, %v1368
        %v1384 = vadd.f32 %v1353, %v1369
        %v1385 = vadd.f32 %v1354, %v1370
        %v1386 = vadd.f32 %v1355, %v1371
        %v1387 = vadd.f32 %v1356, %v1372
        %v1388 = vadd.f32 %v1357, %v1373
        %v1389 = vadd.f32 %v1358, %v1374
        %v1390 = vadd.f32 %v1359, %v1375
        %v1391 = vadd.f32 %v1360, %v1376
        %v1392 = vadd.f32 %v1361, %v1377
        %v1393 = vadd.f32 %v1362, %v1378
        %v1394 = vadd.f32 %v1363, %v1379
        %v1395 = vmax.f32 %v1380, 0.0
        %v1396 = vmax.f32 %v1381, 0.0
        %v1397 = vmax.f32 %v1382, 0.0
        %v1398 = vmax.f32 %v1383, 0.0
        %v1399 = vmax.f32 %v1384, 0.0
        %v1400 = vmax.f32 %v1385, 0.0
        %v1401 = vmax.f32 %v1386, 0.0
        %v1402 = vmax.f32 %v1387, 0.0
        %v1403 = vmax.f32 %v1388, 0.0
        %v1404 = vmax.f32 %v1389, 0.0
        %v1405 = vmax.f32 %v1390, 0.0
        %v1406 = vmax.f32 %v1391, 0.0
        %v1407 = vmax.f32 %v1392, 0.0
        %v1408 = vmax.f32 %v1393, 0.0
        %v1409 = vmax.f32 %v1394, 0.0
        %v1410 = vld [vmem:[%s4] sm:$0xff]
        %v1411 = vld [vmem:[%s4 + $0x8] sm:$0xff]
        %v1412 = vld [vmem:[%s4 + $0x10] sm:$0xff]
        %v1413 = vld [vmem:[%s4 + $0x18] sm:$0xff]
        %v1414 = vld [vmem:[%s4 + $0x20] sm:$0xff]
        %v1415 = vld [vmem:[%s4 + $0x28] sm:$0xff]
        %v1416 = vld [vmem:[%s4 + $0x30] sm:$0xff]
        %v1417 = vld [vmem:[%s4 + $0x38] sm:$0xff]
        %v1418 = vld [vmem:[%s4 + $0x40] sm:$0xff]
        %v1419 = vld [vmem:[%s4 + $0x48] sm:$0xff]
        %v1420 = vld [vmem:[%s4 + $0x50] sm:$0xff]
        %v1421 = vld [vmem:[%s4 + $0x58] sm:$0xff]
        %v1422 = vld [vmem:[%s4 + $0x60] sm:$0xff]
        %v1423 = vld [vmem:[%s4 + $0x68] sm:$0xff]
        %v1424 = vld [vmem:[%s4 + $0x70] sm:$0xff]
        %v1425 = vld [vmem:[%s4 + $0x78] sm:$0xff]
        %v1426 = vld [vmem:[%s4 + $0x80] sm:$0xff]
        %v1427 = vld [vmem:[%s4 + $0x88] sm:$0xff]
        %v1428 = vld [vmem:[%s4 + $0x90] sm:$0xff]
        %v1429 = vld [vmem:[%s4 + $0x98] sm:$0xff]
        %v1430 = vld [vmem:[%s4 + $0xa0] sm:$0xff]
        %v1431 = vld [vmem:[%s4 + $0xa8] sm:$0xff]
        %v1432 = vld [vmem:[%s4 + $0xb0] sm:$0xff]
        %v1433 = vld [vmem:[%s4 + $0xb8] sm:$0xff]
        %v1434 = vld [vmem:[%s4 + $0xc0] sm:$0xff]
        %v1435 = vld [vmem:[%s4 + $0xc8] sm:$0xff]
        %v1436 = vld [vmem:[%s4 + $0xd0] sm:$0xff]
        %v1437 = vld [vmem:[%s4 + $0xd8] sm:$0xff]
        %v1438 = vld [vmem:[%s4 + $0xe0] sm:$0xff]
        %v1439 = vld [vmem:[%s4 + $0xe8] sm:$0xff]
        %v1440 = vld [vmem:[%s4 + $0xf0] sm:$0xff]
        %v1441 = vld [vmem:[%s4 + $0xf8] sm:$0xff]
        %v1442 = vld [vmem:[%s4 + $0x100] sm:$0xff]
        %v1443 = vld [vmem:[%s4 + $0x108] sm:$0xff]
        %v1444 = vld [vmem:[%s4 + $0x110] sm:$0xff]
        %v1445 = vld [vmem:[%s4 + $0x118] sm:$0xff]
        %v1446 = vld [vmem:[%s4 + $0x120] sm:$0xff]
        %v1447 = vld [vmem:[%s4 + $0x128] sm:$0xff]
        %v1448 = vld [vmem:[%s4 + $0x130] sm:$0xff]
        %v1449 = vld [vmem:[%s4 + $0x138] sm:$0xff]
        %v1450 = vld [vmem:[%s4 + $0x140] sm:$0xff]
        %v1451 = vld [vmem:[%s4 + $0x148] sm:$0xff]
        %v1452 = vld [vmem:[%s4 + $0x150] sm:$0xff]
        %v1453 = vld [vmem:[%s4 + $0x158] sm:$0xff]
        %v1454 = vld [vmem:[%s4 + $0x160] sm:$0xff]
        %v1455 = vld [vmem:[%s4 + $0x168] sm:$0xff]
        %v1456 = vld [vmem:[%s4 + $0x170] sm:$0xff]
        %v1457 = vld [vmem:[%s4 + $0x178] sm:$0xff]
        %v1458 = vld [vmem:[%s4 + $0x180] sm:$0xff]
        %v1459 = vld [vmem:[%s4 + $0x188] sm:$0xff]
        %v1460 = vld [vmem:[%s4 + $0x190] sm:$0xff]
        %v1461 = vld [vmem:[%s4 + $0x198] sm:$0xff]
        %v1462 = vld [vmem:[%s4 + $0x1a0] sm:$0xff]
        %v1463 = vld [vmem:[%s4 + $0x1a8] sm:$0xff]
        %v1464 = vld [vmem:[%s4 + $0x1b0] sm:$0xff]
        %v1465 = vld [vmem:[%s4 + $0x1b8] sm:$0xff]
        %v1466 = vld [vmem:[%s4 + $0x1c0] sm:$0xff]
        %v1467 = vld [vmem:[%s4 + $0x1c8] sm:$0xff]
        %v1468 = vld [vmem:[%s4 + $0x1d0] sm:$0xff]
        %v1469 = vld [vmem:[%s4 + $0x1d8] sm:$0xff]
        %v1470 = vld [vmem:[%s4 + $0x1e0] sm:$0xff]
        %v1471 = vld [vmem:[%s4 + $0x1e8] sm:$0xff]
        %v1472 = vld [vmem:[%s4 + $0x1f0] sm:$0xff]
        %v1473 = vld [vmem:[%s4 + $0x1f8] sm:$0xff]
        %v1474 = vld [vmem:[%s4 + $0x200] sm:$0xff]
        %v1475 = vld [vmem:[%s4 + $0x208] sm:$0xff]
        %v1476 = vld [vmem:[%s4 + $0x210] sm:$0xff]
        %v1477 = vld [vmem:[%s4 + $0x218] sm:$0xff]
        %v1478 = vld [vmem:[%s4 + $0x220] sm:$0xff]
        %v1479 = vld [vmem:[%s4 + $0x228] sm:$0xff]
        %v1480 = vld [vmem:[%s4 + $0x230] sm:$0xff]
        %v1481 = vld [vmem:[%s4 + $0x238] sm:$0xff]
        %v1482 = vld [vmem:[%s4 + $0x240] sm:$0xff]
        %v1483 = vld [vmem:[%s4 + $0x248] sm:$0xff]
        %v1484 = vld [vmem:[%s4 + $0x250] sm:$0xff]
        %v1485 = vld [vmem:[%s4 + $0x258] sm:$0xff]
        %v1486 = vld [vmem:[%s4 + $0x260] sm:$0xff]
        %v1487 = vld [vmem:[%s4 + $0x268] sm:$0xff]
        %v1488 = vld [vmem:[%s4 + $0x270] sm:$0xff]
        %v1489 = vld [vmem:[%s4 + $0x278] sm:$0xff]
        %v1490 = vld [vmem:[%s4 + $0x280] sm:$0xff]
        %v1491 = vld [vmem:[%s4 + $0x288] sm:$0xff]
        %v1492 = vld [vmem:[%s4 + $0x290] sm:$0xff]
        %v1493 = vld [vmem:[%s4 + $0x298] sm:$0xff]
        %v1494 = vld [vmem:[%s4 + $0x2a0] sm:$0xff]
        %v1495 = vld [vmem:[%s4 + $0x2a8] sm:$0xff]
        %v1496 = vld [vmem:[%s4 + $0x2b0] sm:$0xff]
        %v1497 = vld [vmem:[%s4 + $0x2b8] sm:$0xff]
        %v1498 = vld [vmem:[%s4 + $0x2c0] sm:$0xff]
        %v1499 = vld [vmem:[%s4 + $0x2c8] sm:$0xff]
        %v1500 = vld [vmem:[%s4 + $0x2d0] sm:$0xff]
        %v1501 = vld [vmem:[%s4 + $0x2d8] sm:$0xff]
        %v1502 = vld [vmem:[%s4 + $0x2e0] sm:$0xff]
        %v1503 = vld [vmem:[%s4 + $0x2e8] sm:$0xff]
        %v1504 = vld [vmem:[%s4 + $0x2f0] sm:$0xff]
        %v1505 = vld [vmem:[%s4 + $0x2f8] sm:$0xff]
        %s1506 = scalar_lea.vmem %s4, 768
        %v1507 = vld [vmem:[%s1506] sm:$0xff]
        %v1508 = vld [vmem:[%s1506 + $0x8] sm:$0xff]
        %v1509 = vld [vmem:[%s1506 + $0x10] sm:$0xff]
        %v1510 = vld [vmem:[%s1506 + $0x18] sm:$0xff]
        %v1511 = vld [vmem:[%s1506 + $0x20] sm:$0xff]
        %v1512 = vld [vmem:[%s1506 + $0x28] sm:$0xff]
        %v1513 = vld [vmem:[%s1506 + $0x30] sm:$0xff]
        %v1514 = vld [vmem:[%s1506 + $0x38] sm:$0xff]
        %v1515 = vld [vmem:[%s1506 + $0x40] sm:$0xff]
        %v1516 = vld [vmem:[%s1506 + $0x48] sm:$0xff]
        %v1517 = vld [vmem:[%s1506 + $0x50] sm:$0xff]
        %v1518 = vld [vmem:[%s1506 + $0x58] sm:$0xff]
        %v1519 = vld [vmem:[%s1506 + $0x60] sm:$0xff]
        %v1520 = vld [vmem:[%s1506 + $0x68] sm:$0xff]
        %v1521 = vld [vmem:[%s1506 + $0x70] sm:$0xff]
        %v1522 = vld [vmem:[%s1506 + $0x78] sm:$0xff]
        %v1523 = vld [vmem:[%s1506 + $0x80] sm:$0xff]
        %v1524 = vld [vmem:[%s1506 + $0x88] sm:$0xff]
        %v1525 = vld [vmem:[%s1506 + $0x90] sm:$0xff]
        %v1526 = vld [vmem:[%s1506 + $0x98] sm:$0xff]
        %v1527 = vld [vmem:[%s1506 + $0xa0] sm:$0xff]
        %v1528 = vld [vmem:[%s1506 + $0xa8] sm:$0xff]
        %v1529 = vld [vmem:[%s1506 + $0xb0] sm:$0xff]
        %v1530 = vld [vmem:[%s1506 + $0xb8] sm:$0xff]
        %v1531 = vld [vmem:[%s1506 + $0xc0] sm:$0xff]
        %v1532 = vld [vmem:[%s1506 + $0xc8] sm:$0xff]
        %v1533 = vld [vmem:[%s1506 + $0xd0] sm:$0xff]
        %v1534 = vld [vmem:[%s1506 + $0xd8] sm:$0xff]
        %v1535 = vld [vmem:[%s1506 + $0xe0] sm:$0xff]
        %v1536 = vld [vmem:[%s1506 + $0xe8] sm:$0xff]
        %v1537 = vld [vmem:[%s1506 + $0xf0] sm:$0xff]
        %v1538 = vld [vmem:[%s1506 + $0xf8] sm:$0xff]
        %v1539 = vld [vmem:[%s1506 + $0x100] sm:$0xff]
        %v1540 = vld [vmem:[%s1506 + $0x108] sm:$0xff]
        %v1541 = vld [vmem:[%s1506 + $0x110] sm:$0xff]
        %v1542 = vld [vmem:[%s1506 + $0x118] sm:$0xff]
        %v1543 = vld [vmem:[%s1506 + $0x120] sm:$0xff]
        %v1544 = vld [vmem:[%s1506 + $0x128] sm:$0xff]
        %v1545 = vld [vmem:[%s1506 + $0x130] sm:$0xff]
        %v1546 = vld [vmem:[%s1506 + $0x138] sm:$0xff]
        %v1547 = vld [vmem:[%s1506 + $0x140] sm:$0xff]
        %v1548 = vld [vmem:[%s1506 + $0x148] sm:$0xff]
        %v1549 = vld [vmem:[%s1506 + $0x150] sm:$0xff]
        %v1550 = vld [vmem:[%s1506 + $0x158] sm:$0xff]
        %v1551 = vld [vmem:[%s1506 + $0x160] sm:$0xff]
        %v1552 = vld [vmem:[%s1506 + $0x168] sm:$0xff]
        %v1553 = vld [vmem:[%s1506 + $0x170] sm:$0xff]
        %v1554 = vld [vmem:[%s1506 + $0x178] sm:$0xff]
        %v1555 = vld [vmem:[%s1506 + $0x180] sm:$0xff]
        %v1556 = vld [vmem:[%s1506 + $0x188] sm:$0xff]
        %v1557 = vld [vmem:[%s1506 + $0x190] sm:$0xff]
        %v1558 = vld [vmem:[%s1506 + $0x198] sm:$0xff]
        %v1559 = vld [vmem:[%s1506 + $0x1a0] sm:$0xff]
        %v1560 = vld [vmem:[%s1506 + $0x1a8] sm:$0xff]
        %v1561 = vld [vmem:[%s1506 + $0x1b0] sm:$0xff]
        %v1562 = vld [vmem:[%s1506 + $0x1b8] sm:$0xff]
        %v1563 = vld [vmem:[%s1506 + $0x1c0] sm:$0xff]
        %v1564 = vld [vmem:[%s1506 + $0x1c8] sm:$0xff]
        %v1565 = vld [vmem:[%s1506 + $0x1d0] sm:$0xff]
        %v1566 = vld [vmem:[%s1506 + $0x1d8] sm:$0xff]
        %v1567 = vld [vmem:[%s1506 + $0x1e0] sm:$0xff]
        %v1568 = vld [vmem:[%s1506 + $0x1e8] sm:$0xff]
        %v1569 = vld [vmem:[%s1506 + $0x1f0] sm:$0xff]
        %v1570 = vld [vmem:[%s1506 + $0x1f8] sm:$0xff]
        %v1571 = vld [vmem:[%s1506 + $0x200] sm:$0xff]
        %v1572 = vld [vmem:[%s1506 + $0x208] sm:$0xff]
        %v1573 = vld [vmem:[%s1506 + $0x210] sm:$0xff]
        %v1574 = vld [vmem:[%s1506 + $0x218] sm:$0xff]
        %v1575 = vld [vmem:[%s1506 + $0x220] sm:$0xff]
        %v1576 = vld [vmem:[%s1506 + $0x228] sm:$0xff]
        %v1577 = vld [vmem:[%s1506 + $0x230] sm:$0xff]
        %v1578 = vld [vmem:[%s1506 + $0x238] sm:$0xff]
        %v1579 = vld [vmem:[%s1506 + $0x240] sm:$0xff]
        %v1580 = vld [vmem:[%s1506 + $0x248] sm:$0xff]
        %v1581 = vld [vmem:[%s1506 + $0x250] sm:$0xff]
        %v1582 = vld [vmem:[%s1506 + $0x258] sm:$0xff]
        %v1583 = vld [vmem:[%s1506 + $0x260] sm:$0xff]
        %v1584 = vld [vmem:[%s1506 + $0x268] sm:$0xff]
        %v1585 = vld [vmem:[%s1506 + $0x270] sm:$0xff]
        %v1586 = vld [vmem:[%s1506 + $0x278] sm:$0xff]
        %v1587 = vld [vmem:[%s1506 + $0x280] sm:$0xff]
        %v1588 = vld [vmem:[%s1506 + $0x288] sm:$0xff]
        %v1589 = vld [vmem:[%s1506 + $0x290] sm:$0xff]
        %v1590 = vld [vmem:[%s1506 + $0x298] sm:$0xff]
        %v1591 = vld [vmem:[%s1506 + $0x2a0] sm:$0xff]
        %v1592 = vld [vmem:[%s1506 + $0x2a8] sm:$0xff]
        %v1593 = vld [vmem:[%s1506 + $0x2b0] sm:$0xff]
        %v1594 = vld [vmem:[%s1506 + $0x2b8] sm:$0xff]
        %v1595 = vld [vmem:[%s1506 + $0x2c0] sm:$0xff]
        %v1596 = vld [vmem:[%s1506 + $0x2c8] sm:$0xff]
        %v1597 = vld [vmem:[%s1506 + $0x2d0] sm:$0xff]
        %v1598 = vld [vmem:[%s1506 + $0x2d8] sm:$0xff]
        %v1599 = vld [vmem:[%s1506 + $0x2e0] sm:$0xff]
        %v1600 = vld [vmem:[%s1506 + $0x2e8] sm:$0xff]
        %v1601 = vld [vmem:[%s1506 + $0x2f0] sm:$0xff]
        %v1602 = vld [vmem:[%s1506 + $0x2f8] sm:$0xff]
        %v1618 = vrot.slane %v1395, 1
        %v1619 = vrot.slane %v1398, 1
        %v1620 = vsel %vm580, %v1618, %v1619
        %v1621 = vrot.slane %v1396, 1
        %v1622 = vrot.slane %v1399, 1
        %v1623 = vsel %vm580, %v1621, %v1622
        %v1624 = vrot.slane %v1397, 1
        %v1625 = vrot.slane %v1400, 1
        %v1626 = vsel %vm580, %v1624, %v1625
        %v1627 = vrot.slane %v1401, 1
        %v1628 = vsel %vm580, %v1619, %v1627
        %v1629 = vrot.slane %v1402, 1
        %v1630 = vsel %vm580, %v1622, %v1629
        %v1631 = vrot.slane %v1403, 1
        %v1632 = vsel %vm580, %v1625, %v1631
        %v1633 = vrot.slane %v1404, 1
        %v1634 = vsel %vm580, %v1627, %v1633
        %v1635 = vrot.slane %v1405, 1
        %v1636 = vsel %vm580, %v1629, %v1635
        %v1637 = vrot.slane %v1406, 1
        %v1638 = vsel %vm580, %v1631, %v1637
        %v1639 = vrot.slane %v1407, 1
        %v1640 = vsel %vm580, %v1633, %v1639
        %v1641 = vrot.slane %v1408, 1
        %v1642 = vsel %vm580, %v1635, %v1641
        %v1643 = vrot.slane %v1409, 1
        %v1644 = vsel %vm580, %v1637, %v1643
        %1657 = vmatpush.msra.mxu0 %v1537
        %1658 = vmatpush.msra.mxu0 %v1535
        %1659 = vmatpush.msra.mxu0 %v1533
        %1660 = vmatpush.msra.mxu0 %v1531
        %1661 = vmatpush.msra.mxu0 %v1529
        %1662 = vmatpush.msra.mxu0 %v1527
        %1663 = vmatpush.msra.mxu0 %v1525
        %1664 = vmatpush.msra.mxu0 %v1523
        %1665 = vmatpush.msra.mxu0 %v1521
        %1666 = vmatpush.msra.mxu0 %v1519
        %1667 = vmatpush.msra.mxu0 %v1517
        %1668 = vmatpush.msra.mxu0 %v1515
        %1669 = vmatpush.msra.mxu0 %v1513
        %1670 = vmatpush.msra.mxu0 %v1511
        %1671 = vmatpush.msra.mxu0 %v1509
        %1672 = vmatpush.msra.mxu0 %v1507
        %1673 = vmatmul.f32.gmra.mxu0 %v1620
        %v1674 = vpop.f32.mrf.mxu0
        %v1675 = vadd.f32 0.0, %v1674
        %1676 = vmatmul.f32.gmra.mxu0 %v1628
        %v1677 = vpop.f32.mrf.mxu0
        %v1678 = vadd.f32 0.0, %v1677
        %1679 = vmatmul.f32.gmra.mxu0 %v1634
        %v1680 = vpop.f32.mrf.mxu0
        %v1681 = vadd.f32 0.0, %v1680
        %1682 = vmatmul.f32.gmra.mxu0 %v1640
        %v1683 = vpop.f32.mrf.mxu0
        %v1684 = vadd.f32 0.0, %v1683
        %1685 = vdwg.mxu0
        %1686 = vmatpush.msra.mxu0 %v1569
        %1687 = vmatpush.msra.mxu0 %v1567
        %1688 = vmatpush.msra.mxu0 %v1565
        %1689 = vmatpush.msra.mxu0 %v1563
        %1690 = vmatpush.msra.mxu0 %v1561
        %1691 = vmatpush.msra.mxu0 %v1559
        %1692 = vmatpush.msra.mxu0 %v1557
        %1693 = vmatpush.msra.mxu0 %v1555
        %1694 = vmatpush.msra.mxu0 %v1553
        %1695 = vmatpush.msra.mxu0 %v1551
        %1696 = vmatpush.msra.mxu0 %v1549
        %1697 = vmatpush.msra.mxu0 %v1547
        %1698 = vmatpush.msra.mxu0 %v1545
        %1699 = vmatpush.msra.mxu0 %v1543
        %1700 = vmatpush.msra.mxu0 %v1541
        %1701 = vmatpush.msra.mxu0 %v1539
        %1702 = vmatmul.f32.gmra.mxu0 %v1623
        %v1703 = vpop.f32.mrf.mxu0
        %v1704 = vadd.f32 %v1675, %v1703
        %1705 = vmatmul.f32.gmra.mxu0 %v1630
        %v1706 = vpop.f32.mrf.mxu0
        %v1707 = vadd.f32 %v1678, %v1706
        %1708 = vmatmul.f32.gmra.mxu0 %v1636
        %v1709 = vpop.f32.mrf.mxu0
        %v1710 = vadd.f32 %v1681, %v1709
        %1711 = vmatmul.f32.gmra.mxu0 %v1642
        %v1712 = vpop.f32.mrf.mxu0
        %v1713 = vadd.f32 %v1684, %v1712
        %1714 = vdwg.mxu0
        %1715 = vmatpush.msra.mxu0 %v1601
        %1716 = vmatpush.msra.mxu0 %v1599
        %1717 = vmatpush.msra.mxu0 %v1597
        %1718 = vmatpush.msra.mxu0 %v1595
        %1719 = vmatpush.msra.mxu0 %v1593
        %1720 = vmatpush.msra.mxu0 %v1591
        %1721 = vmatpush.msra.mxu0 %v1589
        %1722 = vmatpush.msra.mxu0 %v1587
        %1723 = vmatpush.msra.mxu0 %v1585
        %1724 = vmatpush.msra.mxu0 %v1583
        %1725 = vmatpush.msra.mxu0 %v1581
        %1726 = vmatpush.msra.mxu0 %v1579
        %1727 = vmatpush.msra.mxu0 %v1577
        %1728 = vmatpush.msra.mxu0 %v1575
        %1729 = vmatpush.msra.mxu0 %v1573
        %1730 = vmatpush.msra.mxu0 %v1571
        %1731 = vmatmul.f32.gmra.mxu0 %v1626
        %v1732 = vpop.f32.mrf.mxu0
        %v1733 = vadd.f32 %v1704, %v1732
        %1734 = vmatmul.f32.gmra.mxu0 %v1632
        %v1735 = vpop.f32.mrf.mxu0
        %v1736 = vadd.f32 %v1707, %v1735
        %1737 = vmatmul.f32.gmra.mxu0 %v1638
        %v1738 = vpop.f32.mrf.mxu0
        %v1739 = vadd.f32 %v1710, %v1738
        %1740 = vmatmul.f32.gmra.mxu0 %v1644
        %v1741 = vpop.f32.mrf.mxu0
        %v1742 = vadd.f32 %v1713, %v1741
        %1743 = vdwg.mxu0
        %1744 = vmatpush.msra.mxu0 %v1538
        %1745 = vmatpush.msra.mxu0 %v1536
        %1746 = vmatpush.msra.mxu0 %v1534
        %1747 = vmatpush.msra.mxu0 %v1532
        %1748 = vmatpush.msra.mxu0 %v1530
        %1749 = vmatpush.msra.mxu0 %v1528
        %1750 = vmatpush.msra.mxu0 %v1526
        %1751 = vmatpush.msra.mxu0 %v1524
        %1752 = vmatpush.msra.mxu0 %v1522
        %1753 = vmatpush.msra.mxu0 %v1520
        %1754 = vmatpush.msra.mxu0 %v1518
        %1755 = vmatpush.msra.mxu0 %v1516
        %1756 = vmatpush.msra.mxu0 %v1514
        %1757 = vmatpush.msra.mxu0 %v1512
        %1758 = vmatpush.msra.mxu0 %v1510
        %1759 = vmatpush.msra.mxu0 %v1508
        %1760 = vmatmul.f32.gmra.mxu0 %v1620
        %v1761 = vpop.f32.mrf.mxu0
        %v1762 = vadd.f32 0.0, %v1761
        %1763 = vmatmul.f32.gmra.mxu0 %v1628
        %v1764 = vpop.f32.mrf.mxu0
        %v1765 = vadd.f32 0.0, %v1764
        %1766 = vmatmul.f32.gmra.mxu0 %v1634
        %v1767 = vpop.f32.mrf.mxu0
        %v1768 = vadd.f32 0.0, %v1767
        %1769 = vmatmul.f32.gmra.mxu0 %v1640
        %v1770 = vpop.f32.mrf.mxu0
        %v1771 = vadd.f32 0.0, %v1770
        %1772 = vdwg.mxu0
        %1773 = vmatpush.msra.mxu0 %v1570
        %1774 = vmatpush.msra.mxu0 %v1568
        %1775 = vmatpush.msra.mxu0 %v1566
        %1776 = vmatpush.msra.mxu0 %v1564
        %1777 = vmatpush.msra.mxu0 %v1562
        %1778 = vmatpush.msra.mxu0 %v1560
        %1779 = vmatpush.msra.mxu0 %v1558
        %1780 = vmatpush.msra.mxu0 %v1556
        %1781 = vmatpush.msra.mxu0 %v1554
        %1782 = vmatpush.msra.mxu0 %v1552
        %1783 = vmatpush.msra.mxu0 %v1550
        %1784 = vmatpush.msra.mxu0 %v1548
        %1785 = vmatpush.msra.mxu0 %v1546
        %1786 = vmatpush.msra.mxu0 %v1544
        %1787 = vmatpush.msra.mxu0 %v1542
        %1788 = vmatpush.msra.mxu0 %v1540
        %1789 = vmatmul.f32.gmra.mxu0 %v1623
        %v1790 = vpop.f32.mrf.mxu0
        %v1791 = vadd.f32 %v1762, %v1790
        %1792 = vmatmul.f32.gmra.mxu0 %v1630
        %v1793 = vpop.f32.mrf.mxu0
        %v1794 = vadd.f32 %v1765, %v1793
        %1795 = vmatmul.f32.gmra.mxu0 %v1636
        %v1796 = vpop.f32.mrf.mxu0
        %v1797 = vadd.f32 %v1768, %v1796
        %1798 = vmatmul.f32.gmra.mxu0 %v1642
        %v1799 = vpop.f32.mrf.mxu0
        %v1800 = vadd.f32 %v1771, %v1799
        %1801 = vdwg.mxu0
        %1802 = vmatpush.msra.mxu0 %v1602
        %1803 = vmatpush.msra.mxu0 %v1600
        %1804 = vmatpush.msra.mxu0 %v1598
        %1805 = vmatpush.msra.mxu0 %v1596
        %1806 = vmatpush.msra.mxu0 %v1594
        %1807 = vmatpush.msra.mxu0 %v1592
        %1808 = vmatpush.msra.mxu0 %v1590
        %1809 = vmatpush.msra.mxu0 %v1588
        %1810 = vmatpush.msra.mxu0 %v1586
        %1811 = vmatpush.msra.mxu0 %v1584
        %1812 = vmatpush.msra.mxu0 %v1582
        %1813 = vmatpush.msra.mxu0 %v1580
        %1814 = vmatpush.msra.mxu0 %v1578
        %1815 = vmatpush.msra.mxu0 %v1576
        %1816 = vmatpush.msra.mxu0 %v1574
        %1817 = vmatpush.msra.mxu0 %v1572
        %1818 = vmatmul.f32.gmra.mxu0 %v1626
        %v1819 = vpop.f32.mrf.mxu0
        %v1820 = vadd.f32 %v1791, %v1819
        %1821 = vmatmul.f32.gmra.mxu0 %v1632
        %v1822 = vpop.f32.mrf.mxu0
        %v1823 = vadd.f32 %v1794, %v1822
        %1824 = vmatmul.f32.gmra.mxu0 %v1638
        %v1825 = vpop.f32.mrf.mxu0
        %v1826 = vadd.f32 %v1797, %v1825
        %1827 = vmatmul.f32.gmra.mxu0 %v1644
        %v1828 = vpop.f32.mrf.mxu0
        %v1829 = vadd.f32 %v1800, %v1828
        %1830 = vdwg.mxu0
        %1831 = vmatpush.msra.mxu0 %v1440
        %1832 = vmatpush.msra.mxu0 %v1438
        %1833 = vmatpush.msra.mxu0 %v1436
        %1834 = vmatpush.msra.mxu0 %v1434
        %1835 = vmatpush.msra.mxu0 %v1432
        %1836 = vmatpush.msra.mxu0 %v1430
        %1837 = vmatpush.msra.mxu0 %v1428
        %1838 = vmatpush.msra.mxu0 %v1426
        %1839 = vmatpush.msra.mxu0 %v1424
        %1840 = vmatpush.msra.mxu0 %v1422
        %1841 = vmatpush.msra.mxu0 %v1420
        %1842 = vmatpush.msra.mxu0 %v1418
        %1843 = vmatpush.msra.mxu0 %v1416
        %1844 = vmatpush.msra.mxu0 %v1414
        %1845 = vmatpush.msra.mxu0 %v1412
        %1846 = vmatpush.msra.mxu0 %v1410
        %1847 = vmatmul.f32.gmra.mxu0 %v1395
        %v1848 = vpop.f32.mrf.mxu0
        %v1849 = vadd.f32 %v1733, %v1848
        %1850 = vmatmul.f32.gmra.mxu0 %v1398
        %v1851 = vpop.f32.mrf.mxu0
        %v1852 = vadd.f32 %v1736, %v1851
        %1853 = vmatmul.f32.gmra.mxu0 %v1401
        %v1854 = vpop.f32.mrf.mxu0
        %v1855 = vadd.f32 %v1739, %v1854
        %1856 = vmatmul.f32.gmra.mxu0 %v1404
        %v1857 = vpop.f32.mrf.mxu0
        %v1858 = vadd.f32 %v1742, %v1857
        %1859 = vdwg.mxu0
        %1860 = vmatpush.msra.mxu0 %v1472
        %1861 = vmatpush.msra.mxu0 %v1470
        %1862 = vmatpush.msra.mxu0 %v1468
        %1863 = vmatpush.msra.mxu0 %v1466
        %1864 = vmatpush.msra.mxu0 %v1464
        %1865 = vmatpush.msra.mxu0 %v1462
        %1866 = vmatpush.msra.mxu0 %v1460
        %1867 = vmatpush.msra.mxu0 %v1458
        %1868 = vmatpush.msra.mxu0 %v1456
        %1869 = vmatpush.msra.mxu0 %v1454
        %1870 = vmatpush.msra.mxu0 %v1452
        %1871 = vmatpush.msra.mxu0 %v1450
        %1872 = vmatpush.msra.mxu0 %v1448
        %1873 = vmatpush.msra.mxu0 %v1446
        %1874 = vmatpush.msra.mxu0 %v1444
        %1875 = vmatpush.msra.mxu0 %v1442
        %1876 = vmatmul.f32.gmra.mxu0 %v1396
        %v1877 = vpop.f32.mrf.mxu0
        %v1878 = vadd.f32 %v1849, %v1877
        %1879 = vmatmul.f32.gmra.mxu0 %v1399
        %v1880 = vpop.f32.mrf.mxu0
        %v1881 = vadd.f32 %v1852, %v1880
        %1882 = vmatmul.f32.gmra.mxu0 %v1402
        %v1883 = vpop.f32.mrf.mxu0
        %v1884 = vadd.f32 %v1855, %v1883
        %1885 = vmatmul.f32.gmra.mxu0 %v1405
        %v1886 = vpop.f32.mrf.mxu0
        %v1887 = vadd.f32 %v1858, %v1886
        %1888 = vdwg.mxu0
        %1889 = vmatpush.msra.mxu0 %v1504
        %1890 = vmatpush.msra.mxu0 %v1502
        %1891 = vmatpush.msra.mxu0 %v1500
        %1892 = vmatpush.msra.mxu0 %v1498
        %1893 = vmatpush.msra.mxu0 %v1496
        %1894 = vmatpush.msra.mxu0 %v1494
        %1895 = vmatpush.msra.mxu0 %v1492
        %1896 = vmatpush.msra.mxu0 %v1490
        %1897 = vmatpush.msra.mxu0 %v1488
        %1898 = vmatpush.msra.mxu0 %v1486
        %1899 = vmatpush.msra.mxu0 %v1484
        %1900 = vmatpush.msra.mxu0 %v1482
        %1901 = vmatpush.msra.mxu0 %v1480
        %1902 = vmatpush.msra.mxu0 %v1478
        %1903 = vmatpush.msra.mxu0 %v1476
        %1904 = vmatpush.msra.mxu0 %v1474
        %1905 = vmatmul.f32.gmra.mxu0 %v1397
        %v1906 = vpop.f32.mrf.mxu0
        %v1907 = vadd.f32 %v1878, %v1906
        %1908 = vmatmul.f32.gmra.mxu0 %v1400
        %v1909 = vpop.f32.mrf.mxu0
        %v1910 = vadd.f32 %v1881, %v1909
        %1911 = vmatmul.f32.gmra.mxu0 %v1403
        %v1912 = vpop.f32.mrf.mxu0
        %v1913 = vadd.f32 %v1884, %v1912
        %1914 = vmatmul.f32.gmra.mxu0 %v1406
        %v1915 = vpop.f32.mrf.mxu0
        %v1916 = vadd.f32 %v1887, %v1915
        %1917 = vdwg.mxu0
        %1918 = vmatpush.msra.mxu0 %v1441
        %1919 = vmatpush.msra.mxu0 %v1439
        %1920 = vmatpush.msra.mxu0 %v1437
        %1921 = vmatpush.msra.mxu0 %v1435
        %1922 = vmatpush.msra.mxu0 %v1433
        %1923 = vmatpush.msra.mxu0 %v1431
        %1924 = vmatpush.msra.mxu0 %v1429
        %1925 = vmatpush.msra.mxu0 %v1427
        %1926 = vmatpush.msra.mxu0 %v1425
        %1927 = vmatpush.msra.mxu0 %v1423
        %1928 = vmatpush.msra.mxu0 %v1421
        %1929 = vmatpush.msra.mxu0 %v1419
        %1930 = vmatpush.msra.mxu0 %v1417
        %1931 = vmatpush.msra.mxu0 %v1415
        %1932 = vmatpush.msra.mxu0 %v1413
        %1933 = vmatpush.msra.mxu0 %v1411
        %1934 = vmatmul.f32.gmra.mxu0 %v1395
        %v1935 = vpop.f32.mrf.mxu0
        %v1936 = vadd.f32 %v1820, %v1935
        %1937 = vmatmul.f32.gmra.mxu0 %v1398
        %v1938 = vpop.f32.mrf.mxu0
        %v1939 = vadd.f32 %v1823, %v1938
        %1940 = vmatmul.f32.gmra.mxu0 %v1401
        %v1941 = vpop.f32.mrf.mxu0
        %v1942 = vadd.f32 %v1826, %v1941
        %1943 = vmatmul.f32.gmra.mxu0 %v1404
        %v1944 = vpop.f32.mrf.mxu0
        %v1945 = vadd.f32 %v1829, %v1944
        %1946 = vdwg.mxu0
        %1947 = vmatpush.msra.mxu0 %v1473
        %1948 = vmatpush.msra.mxu0 %v1471
        %1949 = vmatpush.msra.mxu0 %v1469
        %1950 = vmatpush.msra.mxu0 %v1467
        %1951 = vmatpush.msra.mxu0 %v1465
        %1952 = vmatpush.msra.mxu0 %v1463
        %1953 = vmatpush.msra.mxu0 %v1461
        %1954 = vmatpush.msra.mxu0 %v1459
        %1955 = vmatpush.msra.mxu0 %v1457
        %1956 = vmatpush.msra.mxu0 %v1455
        %1957 = vmatpush.msra.mxu0 %v1453
        %1958 = vmatpush.msra.mxu0 %v1451
        %1959 = vmatpush.msra.mxu0 %v1449
        %1960 = vmatpush.msra.mxu0 %v1447
        %1961 = vmatpush.msra.mxu0 %v1445
        %1962 = vmatpush.msra.mxu0 %v1443
        %1963 = vmatmul.f32.gmra.mxu0 %v1396
        %v1964 = vpop.f32.mrf.mxu0
        %v1965 = vadd.f32 %v1936, %v1964
        %1966 = vmatmul.f32.gmra.mxu0 %v1399
        %v1967 = vpop.f32.mrf.mxu0
        %v1968 = vadd.f32 %v1939, %v1967
        %1969 = vmatmul.f32.gmra.mxu0 %v1402
        %v1970 = vpop.f32.mrf.mxu0
        %v1971 = vadd.f32 %v1942, %v1970
        %1972 = vmatmul.f32.gmra.mxu0 %v1405
        %v1973 = vpop.f32.mrf.mxu0
        %v1974 = vadd.f32 %v1945, %v1973
        %1975 = vdwg.mxu0
        %1976 = vmatpush.msra.mxu0 %v1505
        %1977 = vmatpush.msra.mxu0 %v1503
        %1978 = vmatpush.msra.mxu0 %v1501
        %1979 = vmatpush.msra.mxu0 %v1499
        %1980 = vmatpush.msra.mxu0 %v1497
        %1981 = vmatpush.msra.mxu0 %v1495
        %1982 = vmatpush.msra.mxu0 %v1493
        %1983 = vmatpush.msra.mxu0 %v1491
        %1984 = vmatpush.msra.mxu0 %v1489
        %1985 = vmatpush.msra.mxu0 %v1487
        %1986 = vmatpush.msra.mxu0 %v1485
        %1987 = vmatpush.msra.mxu0 %v1483
        %1988 = vmatpush.msra.mxu0 %v1481
        %1989 = vmatpush.msra.mxu0 %v1479
        %1990 = vmatpush.msra.mxu0 %v1477
        %1991 = vmatpush.msra.mxu0 %v1475
        %1992 = vmatmul.f32.gmra.mxu0 %v1397
        %v1993 = vpop.f32.mrf.mxu0
        %v1994 = vadd.f32 %v1965, %v1993
        %1995 = vmatmul.f32.gmra.mxu0 %v1400
        %v1996 = vpop.f32.mrf.mxu0
        %v1997 = vadd.f32 %v1968, %v1996
        %1998 = vmatmul.f32.gmra.mxu0 %v1403
        %v1999 = vpop.f32.mrf.mxu0
        %v2000 = vadd.f32 %v1971, %v1999
        %2001 = vmatmul.f32.gmra.mxu0 %v1406
        %v2002 = vpop.f32.mrf.mxu0
        %v2003 = vadd.f32 %v1974, %v2002
        %2004 = vdwg.mxu0
        %s2005 = scalar_lea.vmem %s4, 1536
        %v2006 = vld [vmem:[%s2005] sm:$0xff]
        %v2007 = vld [vmem:[%s2005 + $0x8] sm:$0xff]
        %v2008 = vld [vmem:[%s2005 + $0x10] sm:$0xff]
        %v2009 = vld [vmem:[%s2005 + $0x18] sm:$0xff]
        %v2010 = vld [vmem:[%s2005 + $0x20] sm:$0xff]
        %v2011 = vld [vmem:[%s2005 + $0x28] sm:$0xff]
        %v2012 = vld [vmem:[%s2005 + $0x30] sm:$0xff]
        %v2013 = vld [vmem:[%s2005 + $0x38] sm:$0xff]
        %v2014 = vld [vmem:[%s2005 + $0x40] sm:$0xff]
        %v2015 = vld [vmem:[%s2005 + $0x48] sm:$0xff]
        %v2016 = vld [vmem:[%s2005 + $0x50] sm:$0xff]
        %v2017 = vld [vmem:[%s2005 + $0x58] sm:$0xff]
        %v2018 = vld [vmem:[%s2005 + $0x60] sm:$0xff]
        %v2019 = vld [vmem:[%s2005 + $0x68] sm:$0xff]
        %v2020 = vld [vmem:[%s2005 + $0x70] sm:$0xff]
        %v2021 = vld [vmem:[%s2005 + $0x78] sm:$0xff]
        %v2022 = vld [vmem:[%s2005 + $0x80] sm:$0xff]
        %v2023 = vld [vmem:[%s2005 + $0x88] sm:$0xff]
        %v2024 = vld [vmem:[%s2005 + $0x90] sm:$0xff]
        %v2025 = vld [vmem:[%s2005 + $0x98] sm:$0xff]
        %v2026 = vld [vmem:[%s2005 + $0xa0] sm:$0xff]
        %v2027 = vld [vmem:[%s2005 + $0xa8] sm:$0xff]
        %v2028 = vld [vmem:[%s2005 + $0xb0] sm:$0xff]
        %v2029 = vld [vmem:[%s2005 + $0xb8] sm:$0xff]
        %v2030 = vld [vmem:[%s2005 + $0xc0] sm:$0xff]
        %v2031 = vld [vmem:[%s2005 + $0xc8] sm:$0xff]
        %v2032 = vld [vmem:[%s2005 + $0xd0] sm:$0xff]
        %v2033 = vld [vmem:[%s2005 + $0xd8] sm:$0xff]
        %v2034 = vld [vmem:[%s2005 + $0xe0] sm:$0xff]
        %v2035 = vld [vmem:[%s2005 + $0xe8] sm:$0xff]
        %v2036 = vld [vmem:[%s2005 + $0xf0] sm:$0xff]
        %v2037 = vld [vmem:[%s2005 + $0xf8] sm:$0xff]
        %v2038 = vld [vmem:[%s2005 + $0x100] sm:$0xff]
        %v2039 = vld [vmem:[%s2005 + $0x108] sm:$0xff]
        %v2040 = vld [vmem:[%s2005 + $0x110] sm:$0xff]
        %v2041 = vld [vmem:[%s2005 + $0x118] sm:$0xff]
        %v2042 = vld [vmem:[%s2005 + $0x120] sm:$0xff]
        %v2043 = vld [vmem:[%s2005 + $0x128] sm:$0xff]
        %v2044 = vld [vmem:[%s2005 + $0x130] sm:$0xff]
        %v2045 = vld [vmem:[%s2005 + $0x138] sm:$0xff]
        %v2046 = vld [vmem:[%s2005 + $0x140] sm:$0xff]
        %v2047 = vld [vmem:[%s2005 + $0x148] sm:$0xff]
        %v2048 = vld [vmem:[%s2005 + $0x150] sm:$0xff]
        %v2049 = vld [vmem:[%s2005 + $0x158] sm:$0xff]
        %v2050 = vld [vmem:[%s2005 + $0x160] sm:$0xff]
        %v2051 = vld [vmem:[%s2005 + $0x168] sm:$0xff]
        %v2052 = vld [vmem:[%s2005 + $0x170] sm:$0xff]
        %v2053 = vld [vmem:[%s2005 + $0x178] sm:$0xff]
        %v2054 = vld [vmem:[%s2005 + $0x180] sm:$0xff]
        %v2055 = vld [vmem:[%s2005 + $0x188] sm:$0xff]
        %v2056 = vld [vmem:[%s2005 + $0x190] sm:$0xff]
        %v2057 = vld [vmem:[%s2005 + $0x198] sm:$0xff]
        %v2058 = vld [vmem:[%s2005 + $0x1a0] sm:$0xff]
        %v2059 = vld [vmem:[%s2005 + $0x1a8] sm:$0xff]
        %v2060 = vld [vmem:[%s2005 + $0x1b0] sm:$0xff]
        %v2061 = vld [vmem:[%s2005 + $0x1b8] sm:$0xff]
        %v2062 = vld [vmem:[%s2005 + $0x1c0] sm:$0xff]
        %v2063 = vld [vmem:[%s2005 + $0x1c8] sm:$0xff]
        %v2064 = vld [vmem:[%s2005 + $0x1d0] sm:$0xff]
        %v2065 = vld [vmem:[%s2005 + $0x1d8] sm:$0xff]
        %v2066 = vld [vmem:[%s2005 + $0x1e0] sm:$0xff]
        %v2067 = vld [vmem:[%s2005 + $0x1e8] sm:$0xff]
        %v2068 = vld [vmem:[%s2005 + $0x1f0] sm:$0xff]
        %v2069 = vld [vmem:[%s2005 + $0x1f8] sm:$0xff]
        %v2070 = vld [vmem:[%s2005 + $0x200] sm:$0xff]
        %v2071 = vld [vmem:[%s2005 + $0x208] sm:$0xff]
        %v2072 = vld [vmem:[%s2005 + $0x210] sm:$0xff]
        %v2073 = vld [vmem:[%s2005 + $0x218] sm:$0xff]
        %v2074 = vld [vmem:[%s2005 + $0x220] sm:$0xff]
        %v2075 = vld [vmem:[%s2005 + $0x228] sm:$0xff]
        %v2076 = vld [vmem:[%s2005 + $0x230] sm:$0xff]
        %v2077 = vld [vmem:[%s2005 + $0x238] sm:$0xff]
        %v2078 = vld [vmem:[%s2005 + $0x240] sm:$0xff]
        %v2079 = vld [vmem:[%s2005 + $0x248] sm:$0xff]
        %v2080 = vld [vmem:[%s2005 + $0x250] sm:$0xff]
        %v2081 = vld [vmem:[%s2005 + $0x258] sm:$0xff]
        %v2082 = vld [vmem:[%s2005 + $0x260] sm:$0xff]
        %v2083 = vld [vmem:[%s2005 + $0x268] sm:$0xff]
        %v2084 = vld [vmem:[%s2005 + $0x270] sm:$0xff]
        %v2085 = vld [vmem:[%s2005 + $0x278] sm:$0xff]
        %v2086 = vld [vmem:[%s2005 + $0x280] sm:$0xff]
        %v2087 = vld [vmem:[%s2005 + $0x288] sm:$0xff]
        %v2088 = vld [vmem:[%s2005 + $0x290] sm:$0xff]
        %v2089 = vld [vmem:[%s2005 + $0x298] sm:$0xff]
        %v2090 = vld [vmem:[%s2005 + $0x2a0] sm:$0xff]
        %v2091 = vld [vmem:[%s2005 + $0x2a8] sm:$0xff]
        %v2092 = vld [vmem:[%s2005 + $0x2b0] sm:$0xff]
        %v2093 = vld [vmem:[%s2005 + $0x2b8] sm:$0xff]
        %v2094 = vld [vmem:[%s2005 + $0x2c0] sm:$0xff]
        %v2095 = vld [vmem:[%s2005 + $0x2c8] sm:$0xff]
        %v2096 = vld [vmem:[%s2005 + $0x2d0] sm:$0xff]
        %v2097 = vld [vmem:[%s2005 + $0x2d8] sm:$0xff]
        %v2098 = vld [vmem:[%s2005 + $0x2e0] sm:$0xff]
        %v2099 = vld [vmem:[%s2005 + $0x2e8] sm:$0xff]
        %v2100 = vld [vmem:[%s2005 + $0x2f0] sm:$0xff]
        %v2101 = vld [vmem:[%s2005 + $0x2f8] sm:$0xff]
        %v2102 = vrot.slane %v1395, 2
        %v2103 = vrot.slane %v1398, 2
        %v2104 = vsel %vm1094, %v2102, %v2103
        %v2105 = vrot.slane %v1396, 2
        %v2106 = vrot.slane %v1399, 2
        %v2107 = vsel %vm1094, %v2105, %v2106
        %v2108 = vrot.slane %v1397, 2
        %v2109 = vrot.slane %v1400, 2
        %v2110 = vsel %vm1094, %v2108, %v2109
        %v2111 = vrot.slane %v1401, 2
        %v2112 = vsel %vm1094, %v2103, %v2111
        %v2113 = vrot.slane %v1402, 2
        %v2114 = vsel %vm1094, %v2106, %v2113
        %v2115 = vrot.slane %v1403, 2
        %v2116 = vsel %vm1094, %v2109, %v2115
        %v2117 = vrot.slane %v1404, 2
        %v2118 = vsel %vm1094, %v2111, %v2117
        %v2119 = vrot.slane %v1405, 2
        %v2120 = vsel %vm1094, %v2113, %v2119
        %v2121 = vrot.slane %v1406, 2
        %v2122 = vsel %vm1094, %v2115, %v2121
        %v2123 = vrot.slane %v1407, 2
        %v2124 = vsel %vm1094, %v2117, %v2123
        %v2125 = vrot.slane %v1408, 2
        %v2126 = vsel %vm1094, %v2119, %v2125
        %v2127 = vrot.slane %v1409, 2
        %v2128 = vsel %vm1094, %v2121, %v2127
        %2141 = vmatpush.msra.mxu0 %v2036
        %2142 = vmatpush.msra.mxu0 %v2034
        %2143 = vmatpush.msra.mxu0 %v2032
        %2144 = vmatpush.msra.mxu0 %v2030
        %2145 = vmatpush.msra.mxu0 %v2028
        %2146 = vmatpush.msra.mxu0 %v2026
        %2147 = vmatpush.msra.mxu0 %v2024
        %2148 = vmatpush.msra.mxu0 %v2022
        %2149 = vmatpush.msra.mxu0 %v2020
        %2150 = vmatpush.msra.mxu0 %v2018
        %2151 = vmatpush.msra.mxu0 %v2016
        %2152 = vmatpush.msra.mxu0 %v2014
        %2153 = vmatpush.msra.mxu0 %v2012
        %2154 = vmatpush.msra.mxu0 %v2010
        %2155 = vmatpush.msra.mxu0 %v2008
        %2156 = vmatpush.msra.mxu0 %v2006
        %2157 = vmatmul.f32.gmra.mxu0 %v2104
        %v2158 = vpop.f32.mrf.mxu0
        %v2159 = vadd.f32 0.0, %v2158
        %2160 = vmatmul.f32.gmra.mxu0 %v2112
        %v2161 = vpop.f32.mrf.mxu0
        %v2162 = vadd.f32 0.0, %v2161
        %2163 = vmatmul.f32.gmra.mxu0 %v2118
        %v2164 = vpop.f32.mrf.mxu0
        %v2165 = vadd.f32 0.0, %v2164
        %2166 = vmatmul.f32.gmra.mxu0 %v2124
        %v2167 = vpop.f32.mrf.mxu0
        %v2168 = vadd.f32 0.0, %v2167
        %2169 = vdwg.mxu0
        %2170 = vmatpush.msra.mxu0 %v2068
        %2171 = vmatpush.msra.mxu0 %v2066
        %2172 = vmatpush.msra.mxu0 %v2064
        %2173 = vmatpush.msra.mxu0 %v2062
        %2174 = vmatpush.msra.mxu0 %v2060
        %2175 = vmatpush.msra.mxu0 %v2058
        %2176 = vmatpush.msra.mxu0 %v2056
        %2177 = vmatpush.msra.mxu0 %v2054
        %2178 = vmatpush.msra.mxu0 %v2052
        %2179 = vmatpush.msra.mxu0 %v2050
        %2180 = vmatpush.msra.mxu0 %v2048
        %2181 = vmatpush.msra.mxu0 %v2046
        %2182 = vmatpush.msra.mxu0 %v2044
        %2183 = vmatpush.msra.mxu0 %v2042
        %2184 = vmatpush.msra.mxu0 %v2040
        %2185 = vmatpush.msra.mxu0 %v2038
        %2186 = vmatmul.f32.gmra.mxu0 %v2107
        %v2187 = vpop.f32.mrf.mxu0
        %v2188 = vadd.f32 %v2159, %v2187
        %2189 = vmatmul.f32.gmra.mxu0 %v2114
        %v2190 = vpop.f32.mrf.mxu0
        %v2191 = vadd.f32 %v2162, %v2190
        %2192 = vmatmul.f32.gmra.mxu0 %v2120
        %v2193 = vpop.f32.mrf.mxu0
        %v2194 = vadd.f32 %v2165, %v2193
        %2195 = vmatmul.f32.gmra.mxu0 %v2126
        %v2196 = vpop.f32.mrf.mxu0
        %v2197 = vadd.f32 %v2168, %v2196
        %2198 = vdwg.mxu0
        %2199 = vmatpush.msra.mxu0 %v2100
        %2200 = vmatpush.msra.mxu0 %v2098
        %2201 = vmatpush.msra.mxu0 %v2096
        %2202 = vmatpush.msra.mxu0 %v2094
        %2203 = vmatpush.msra.mxu0 %v2092
        %2204 = vmatpush.msra.mxu0 %v2090
        %2205 = vmatpush.msra.mxu0 %v2088
        %2206 = vmatpush.msra.mxu0 %v2086
        %2207 = vmatpush.msra.mxu0 %v2084
        %2208 = vmatpush.msra.mxu0 %v2082
        %2209 = vmatpush.msra.mxu0 %v2080
        %2210 = vmatpush.msra.mxu0 %v2078
        %2211 = vmatpush.msra.mxu0 %v2076
        %2212 = vmatpush.msra.mxu0 %v2074
        %2213 = vmatpush.msra.mxu0 %v2072
        %2214 = vmatpush.msra.mxu0 %v2070
        %2215 = vmatmul.f32.gmra.mxu0 %v2110
        %v2216 = vpop.f32.mrf.mxu0
        %v2217 = vadd.f32 %v2188, %v2216
        %2218 = vmatmul.f32.gmra.mxu0 %v2116
        %v2219 = vpop.f32.mrf.mxu0
        %v2220 = vadd.f32 %v2191, %v2219
        %2221 = vmatmul.f32.gmra.mxu0 %v2122
        %v2222 = vpop.f32.mrf.mxu0
        %v2223 = vadd.f32 %v2194, %v2222
        %2224 = vmatmul.f32.gmra.mxu0 %v2128
        %v2225 = vpop.f32.mrf.mxu0
        %v2226 = vadd.f32 %v2197, %v2225
        %2227 = vdwg.mxu0
        %2228 = vmatpush.msra.mxu0 %v2037
        %2229 = vmatpush.msra.mxu0 %v2035
        %2230 = vmatpush.msra.mxu0 %v2033
        %2231 = vmatpush.msra.mxu0 %v2031
        %2232 = vmatpush.msra.mxu0 %v2029
        %2233 = vmatpush.msra.mxu0 %v2027
        %2234 = vmatpush.msra.mxu0 %v2025
        %2235 = vmatpush.msra.mxu0 %v2023
        %2236 = vmatpush.msra.mxu0 %v2021
        %2237 = vmatpush.msra.mxu0 %v2019
        %2238 = vmatpush.msra.mxu0 %v2017
        %2239 = vmatpush.msra.mxu0 %v2015
        %2240 = vmatpush.msra.mxu0 %v2013
        %2241 = vmatpush.msra.mxu0 %v2011
        %2242 = vmatpush.msra.mxu0 %v2009
        %2243 = vmatpush.msra.mxu0 %v2007
        %2244 = vmatmul.f32.gmra.mxu0 %v2104
        %v2245 = vpop.f32.mrf.mxu0
        %v2246 = vadd.f32 0.0, %v2245
        %2247 = vmatmul.f32.gmra.mxu0 %v2112
        %v2248 = vpop.f32.mrf.mxu0
        %v2249 = vadd.f32 0.0, %v2248
        %2250 = vmatmul.f32.gmra.mxu0 %v2118
        %v2251 = vpop.f32.mrf.mxu0
        %v2252 = vadd.f32 0.0, %v2251
        %2253 = vmatmul.f32.gmra.mxu0 %v2124
        %v2254 = vpop.f32.mrf.mxu0
        %v2255 = vadd.f32 0.0, %v2254
        %2256 = vdwg.mxu0
        %2257 = vmatpush.msra.mxu0 %v2069
        %2258 = vmatpush.msra.mxu0 %v2067
        %2259 = vmatpush.msra.mxu0 %v2065
        %2260 = vmatpush.msra.mxu0 %v2063
        %2261 = vmatpush.msra.mxu0 %v2061
        %2262 = vmatpush.msra.mxu0 %v2059
        %2263 = vmatpush.msra.mxu0 %v2057
        %2264 = vmatpush.msra.mxu0 %v2055
        %2265 = vmatpush.msra.mxu0 %v2053
        %2266 = vmatpush.msra.mxu0 %v2051
        %2267 = vmatpush.msra.mxu0 %v2049
        %2268 = vmatpush.msra.mxu0 %v2047
        %2269 = vmatpush.msra.mxu0 %v2045
        %2270 = vmatpush.msra.mxu0 %v2043
        %2271 = vmatpush.msra.mxu0 %v2041
        %2272 = vmatpush.msra.mxu0 %v2039
        %2273 = vmatmul.f32.gmra.mxu0 %v2107
        %v2274 = vpop.f32.mrf.mxu0
        %v2275 = vadd.f32 %v2246, %v2274
        %2276 = vmatmul.f32.gmra.mxu0 %v2114
        %v2277 = vpop.f32.mrf.mxu0
        %v2278 = vadd.f32 %v2249, %v2277
        %2279 = vmatmul.f32.gmra.mxu0 %v2120
        %v2280 = vpop.f32.mrf.mxu0
        %v2281 = vadd.f32 %v2252, %v2280
        %2282 = vmatmul.f32.gmra.mxu0 %v2126
        %v2283 = vpop.f32.mrf.mxu0
        %v2284 = vadd.f32 %v2255, %v2283
        %2285 = vdwg.mxu0
        %2286 = vmatpush.msra.mxu0 %v2101
        %2287 = vmatpush.msra.mxu0 %v2099
        %2288 = vmatpush.msra.mxu0 %v2097
        %2289 = vmatpush.msra.mxu0 %v2095
        %2290 = vmatpush.msra.mxu0 %v2093
        %2291 = vmatpush.msra.mxu0 %v2091
        %2292 = vmatpush.msra.mxu0 %v2089
        %2293 = vmatpush.msra.mxu0 %v2087
        %2294 = vmatpush.msra.mxu0 %v2085
        %2295 = vmatpush.msra.mxu0 %v2083
        %2296 = vmatpush.msra.mxu0 %v2081
        %2297 = vmatpush.msra.mxu0 %v2079
        %2298 = vmatpush.msra.mxu0 %v2077
        %2299 = vmatpush.msra.mxu0 %v2075
        %2300 = vmatpush.msra.mxu0 %v2073
        %2301 = vmatpush.msra.mxu0 %v2071
        %2302 = vmatmul.f32.gmra.mxu0 %v2110
        %v2303 = vpop.f32.mrf.mxu0
        %v2304 = vadd.f32 %v2275, %v2303
        %2305 = vmatmul.f32.gmra.mxu0 %v2116
        %v2306 = vpop.f32.mrf.mxu0
        %v2307 = vadd.f32 %v2278, %v2306
        %2308 = vmatmul.f32.gmra.mxu0 %v2122
        %v2309 = vpop.f32.mrf.mxu0
        %v2310 = vadd.f32 %v2281, %v2309
        %2311 = vmatmul.f32.gmra.mxu0 %v2128
        %v2312 = vpop.f32.mrf.mxu0
        %v2313 = vadd.f32 %v2284, %v2312
        %2314 = vdwg.mxu0
        %v2315 = vadd.f32 %v1907, %v2217
        %v2316 = vadd.f32 %v1994, %v2304
        %v2317 = vadd.f32 %v1910, %v2220
        %v2318 = vadd.f32 %v1997, %v2307
        %v2319 = vadd.f32 %v1913, %v2223
        %v2320 = vadd.f32 %v2000, %v2310
        %v2321 = vadd.f32 %v1916, %v2226
        %v2322 = vadd.f32 %v2003, %v2313
        %v2323 = vld [vmem:[#allocation6] sm:$0xff]
        %v2324 = vld [vmem:[#allocation6 + $0x8] sm:$0xff]
        %v2325 = vld [vmem:[#allocation6 + $0x10] sm:$0xff]
        %v2326 = vld [vmem:[#allocation6 + $0x18] sm:$0xff]
        %v2327 = vld [vmem:[#allocation6 + $0x20] sm:$0xff]
        %v2328 = vld [vmem:[#allocation6 + $0x28] sm:$0xff]
        %v2329 = vld [vmem:[#allocation6 + $0x30] sm:$0xff]
        %v2330 = vld [vmem:[#allocation6 + $0x38] sm:$0xff]
        %v2331 = vld [vmem:[#allocation6 + $0x40] sm:$0xff]
        %v2332 = vld [vmem:[#allocation6 + $0x48] sm:$0xff]
        %v2333 = vld [vmem:[#allocation6 + $0x50] sm:$0xff]
        %v2334 = vld [vmem:[#allocation6 + $0x58] sm:$0xff]
        %v2335 = vld [vmem:[#allocation6 + $0x60] sm:$0xff]
        %v2336 = vld [vmem:[#allocation6 + $0x68] sm:$0xff]
        %v2337 = vld [vmem:[#allocation6 + $0x70] sm:$0xff]
        %v2338 = vld [vmem:[#allocation6 + $0x78] sm:$0xff]
        %v2339 = vld [vmem:[#allocation6 + $0x80] sm:$0xff]
        %v2340 = vld [vmem:[#allocation6 + $0x88] sm:$0xff]
        %v2341 = vld [vmem:[#allocation6 + $0x90] sm:$0xff]
        %v2342 = vld [vmem:[#allocation6 + $0x98] sm:$0xff]
        %v2343 = vld [vmem:[#allocation6 + $0xa0] sm:$0xff]
        %v2344 = vld [vmem:[#allocation6 + $0xa8] sm:$0xff]
        %v2345 = vld [vmem:[#allocation6 + $0xb0] sm:$0xff]
        %v2346 = vld [vmem:[#allocation6 + $0xb8] sm:$0xff]
        %v2347 = vld [vmem:[#allocation6 + $0xc0] sm:$0xff]
        %v2348 = vld [vmem:[#allocation6 + $0xc8] sm:$0xff]
        %v2349 = vld [vmem:[#allocation6 + $0xd0] sm:$0xff]
        %v2350 = vld [vmem:[#allocation6 + $0xd8] sm:$0xff]
        %v2351 = vld [vmem:[#allocation6 + $0xe0] sm:$0xff]
        %v2352 = vld [vmem:[#allocation6 + $0xe8] sm:$0xff]
        %v2353 = vld [vmem:[#allocation6 + $0xf0] sm:$0xff]
        %v2354 = vld [vmem:[#allocation6 + $0xf8] sm:$0xff]
        %v2355 = vld [vmem:[#allocation6 + $0x100] sm:$0xff]
        %v2356 = vld [vmem:[#allocation6 + $0x108] sm:$0xff]
        %v2357 = vld [vmem:[#allocation6 + $0x110] sm:$0xff]
        %v2358 = vld [vmem:[#allocation6 + $0x118] sm:$0xff]
        %v2359 = vld [vmem:[#allocation6 + $0x120] sm:$0xff]
        %v2360 = vld [vmem:[#allocation6 + $0x128] sm:$0xff]
        %v2361 = vld [vmem:[#allocation6 + $0x130] sm:$0xff]
        %v2362 = vld [vmem:[#allocation6 + $0x138] sm:$0xff]
        %v2363 = vld [vmem:[#allocation6 + $0x140] sm:$0xff]
        %v2364 = vld [vmem:[#allocation6 + $0x148] sm:$0xff]
        %v2365 = vld [vmem:[#allocation6 + $0x150] sm:$0xff]
        %v2366 = vld [vmem:[#allocation6 + $0x158] sm:$0xff]
        %v2367 = vld [vmem:[#allocation6 + $0x160] sm:$0xff]
        %v2368 = vld [vmem:[#allocation6 + $0x168] sm:$0xff]
        %v2369 = vld [vmem:[#allocation6 + $0x170] sm:$0xff]
        %v2370 = vld [vmem:[#allocation6 + $0x178] sm:$0xff]
        %v2371 = vld [vmem:[#allocation6 + $0x180] sm:$0xff]
        %v2372 = vld [vmem:[#allocation6 + $0x188] sm:$0xff]
        %v2373 = vld [vmem:[#allocation6 + $0x190] sm:$0xff]
        %v2374 = vld [vmem:[#allocation6 + $0x198] sm:$0xff]
        %v2375 = vld [vmem:[#allocation6 + $0x1a0] sm:$0xff]
        %v2376 = vld [vmem:[#allocation6 + $0x1a8] sm:$0xff]
        %v2377 = vld [vmem:[#allocation6 + $0x1b0] sm:$0xff]
        %v2378 = vld [vmem:[#allocation6 + $0x1b8] sm:$0xff]
        %v2379 = vld [vmem:[#allocation6 + $0x1c0] sm:$0xff]
        %v2380 = vld [vmem:[#allocation6 + $0x1c8] sm:$0xff]
        %v2381 = vld [vmem:[#allocation6 + $0x1d0] sm:$0xff]
        %v2382 = vld [vmem:[#allocation6 + $0x1d8] sm:$0xff]
        %v2383 = vld [vmem:[#allocation6 + $0x1e0] sm:$0xff]
        %v2384 = vld [vmem:[#allocation6 + $0x1e8] sm:$0xff]
        %v2385 = vld [vmem:[#allocation6 + $0x1f0] sm:$0xff]
        %v2386 = vld [vmem:[#allocation6 + $0x1f8] sm:$0xff]
        %v2397 = vrot.slane %v302, 2
        %v2398 = vrot.slane %v304, 2
        %v2399 = vsel %vm1094, %v2397, %v2398
        %v2400 = vrot.slane %v303, 2
        %v2401 = vrot.slane %v305, 2
        %v2402 = vsel %vm1094, %v2400, %v2401
        %v2403 = vrot.slane %v306, 2
        %v2404 = vsel %vm1094, %v2398, %v2403
        %v2405 = vrot.slane %v307, 2
        %v2406 = vsel %vm1094, %v2401, %v2405
        %v2407 = vrot.slane %v308, 2
        %v2408 = vsel %vm1094, %v2403, %v2407
        %v2409 = vrot.slane %v309, 2
        %v2410 = vsel %vm1094, %v2405, %v2409
        %v2411 = vrot.slane %v310, 2
        %v2412 = vsel %vm1094, %v2407, %v2411
        %v2413 = vrot.slane %v311, 2
        %v2414 = vsel %vm1094, %v2409, %v2413
        %2423 = vmatpush.msra.mxu0 %v2353
        %2424 = vmatpush.msra.mxu0 %v2351
        %2425 = vmatpush.msra.mxu0 %v2349
        %2426 = vmatpush.msra.mxu0 %v2347
        %2427 = vmatpush.msra.mxu0 %v2345
        %2428 = vmatpush.msra.mxu0 %v2343
        %2429 = vmatpush.msra.mxu0 %v2341
        %2430 = vmatpush.msra.mxu0 %v2339
        %2431 = vmatpush.msra.mxu0 %v2337
        %2432 = vmatpush.msra.mxu0 %v2335
        %2433 = vmatpush.msra.mxu0 %v2333
        %2434 = vmatpush.msra.mxu0 %v2331
        %2435 = vmatpush.msra.mxu0 %v2329
        %2436 = vmatpush.msra.mxu0 %v2327
        %2437 = vmatpush.msra.mxu0 %v2325
        %2438 = vmatpush.msra.mxu0 %v2323
        %2439 = vmatmul.f32.gmra.mxu0 %v2399
        %v2440 = vpop.f32.mrf.mxu0
        %v2441 = vadd.f32 0.0, %v2440
        %2442 = vmatmul.f32.gmra.mxu0 %v2404
        %v2443 = vpop.f32.mrf.mxu0
        %v2444 = vadd.f32 0.0, %v2443
        %2445 = vmatmul.f32.gmra.mxu0 %v2408
        %v2446 = vpop.f32.mrf.mxu0
        %v2447 = vadd.f32 0.0, %v2446
        %2448 = vmatmul.f32.gmra.mxu0 %v2412
        %v2449 = vpop.f32.mrf.mxu0
        %v2450 = vadd.f32 0.0, %v2449
        %2451 = vdwg.mxu0
        %2452 = vmatpush.msra.mxu0 %v2385
        %2453 = vmatpush.msra.mxu0 %v2383
        %2454 = vmatpush.msra.mxu0 %v2381
        %2455 = vmatpush.msra.mxu0 %v2379
        %2456 = vmatpush.msra.mxu0 %v2377
        %2457 = vmatpush.msra.mxu0 %v2375
        %2458 = vmatpush.msra.mxu0 %v2373
        %2459 = vmatpush.msra.mxu0 %v2371
        %2460 = vmatpush.msra.mxu0 %v2369
        %2461 = vmatpush.msra.mxu0 %v2367
        %2462 = vmatpush.msra.mxu0 %v2365
        %2463 = vmatpush.msra.mxu0 %v2363
        %2464 = vmatpush.msra.mxu0 %v2361
        %2465 = vmatpush.msra.mxu0 %v2359
        %2466 = vmatpush.msra.mxu0 %v2357
        %2467 = vmatpush.msra.mxu0 %v2355
        %2468 = vmatmul.f32.gmra.mxu0 %v2402
        %v2469 = vpop.f32.mrf.mxu0
        %v2470 = vadd.f32 %v2441, %v2469
        %2471 = vmatmul.f32.gmra.mxu0 %v2406
        %v2472 = vpop.f32.mrf.mxu0
        %v2473 = vadd.f32 %v2444, %v2472
        %2474 = vmatmul.f32.gmra.mxu0 %v2410
        %v2475 = vpop.f32.mrf.mxu0
        %v2476 = vadd.f32 %v2447, %v2475
        %2477 = vmatmul.f32.gmra.mxu0 %v2414
        %v2478 = vpop.f32.mrf.mxu0
        %v2479 = vadd.f32 %v2450, %v2478
        %2480 = vdwg.mxu0
        %2481 = vmatpush.msra.mxu0 %v2354
        %2482 = vmatpush.msra.mxu0 %v2352
        %2483 = vmatpush.msra.mxu0 %v2350
        %2484 = vmatpush.msra.mxu0 %v2348
        %2485 = vmatpush.msra.mxu0 %v2346
        %2486 = vmatpush.msra.mxu0 %v2344
        %2487 = vmatpush.msra.mxu0 %v2342
        %2488 = vmatpush.msra.mxu0 %v2340
        %2489 = vmatpush.msra.mxu0 %v2338
        %2490 = vmatpush.msra.mxu0 %v2336
        %2491 = vmatpush.msra.mxu0 %v2334
        %2492 = vmatpush.msra.mxu0 %v2332
        %2493 = vmatpush.msra.mxu0 %v2330
        %2494 = vmatpush.msra.mxu0 %v2328
        %2495 = vmatpush.msra.mxu0 %v2326
        %2496 = vmatpush.msra.mxu0 %v2324
        %2497 = vmatmul.f32.gmra.mxu0 %v2399
        %v2498 = vpop.f32.mrf.mxu0
        %v2499 = vadd.f32 0.0, %v2498
        %2500 = vmatmul.f32.gmra.mxu0 %v2404
        %v2501 = vpop.f32.mrf.mxu0
        %v2502 = vadd.f32 0.0, %v2501
        %2503 = vmatmul.f32.gmra.mxu0 %v2408
        %v2504 = vpop.f32.mrf.mxu0
        %v2505 = vadd.f32 0.0, %v2504
        %2506 = vmatmul.f32.gmra.mxu0 %v2412
        %v2507 = vpop.f32.mrf.mxu0
        %v2508 = vadd.f32 0.0, %v2507
        %2509 = vdwg.mxu0
        %2510 = vmatpush.msra.mxu0 %v2386
        %2511 = vmatpush.msra.mxu0 %v2384
        %2512 = vmatpush.msra.mxu0 %v2382
        %2513 = vmatpush.msra.mxu0 %v2380
        %2514 = vmatpush.msra.mxu0 %v2378
        %2515 = vmatpush.msra.mxu0 %v2376
        %2516 = vmatpush.msra.mxu0 %v2374
        %2517 = vmatpush.msra.mxu0 %v2372
        %2518 = vmatpush.msra.mxu0 %v2370
        %2519 = vmatpush.msra.mxu0 %v2368
        %2520 = vmatpush.msra.mxu0 %v2366
        %2521 = vmatpush.msra.mxu0 %v2364
        %2522 = vmatpush.msra.mxu0 %v2362
        %2523 = vmatpush.msra.mxu0 %v2360
        %2524 = vmatpush.msra.mxu0 %v2358
        %2525 = vmatpush.msra.mxu0 %v2356
        %2526 = vmatmul.f32.gmra.mxu0 %v2402
        %v2527 = vpop.f32.mrf.mxu0
        %v2528 = vadd.f32 %v2499, %v2527
        %2529 = vmatmul.f32.gmra.mxu0 %v2406
        %v2530 = vpop.f32.mrf.mxu0
        %v2531 = vadd.f32 %v2502, %v2530
        %2532 = vmatmul.f32.gmra.mxu0 %v2410
        %v2533 = vpop.f32.mrf.mxu0
        %v2534 = vadd.f32 %v2505, %v2533
        %2535 = vmatmul.f32.gmra.mxu0 %v2414
        %v2536 = vpop.f32.mrf.mxu0
        %v2537 = vadd.f32 %v2508, %v2536
        %2538 = vdwg.mxu0
        %v2539 = vadd.f32 %v2315, %v2470
        %v2540 = vadd.f32 %v2316, %v2528
        %v2541 = vadd.f32 %v2317, %v2473
        %v2542 = vadd.f32 %v2318, %v2531
        %v2543 = vadd.f32 %v2319, %v2476
        %v2544 = vadd.f32 %v2320, %v2534
        %v2545 = vadd.f32 %v2321, %v2479
        %v2546 = vadd.f32 %v2322, %v2537
        %2547 = vst [vmem:[%s301] sm:$0xff] %v2539
        %2548 = vst [vmem:[%s301 + $0x8] sm:$0xff] %v2540
        %2549 = vst [vmem:[%s301 + $0x10] sm:$0xff] %v2541
        %2550 = vst [vmem:[%s301 + $0x18] sm:$0xff] %v2542
        %2551 = vst [vmem:[%s301 + $0x20] sm:$0xff] %v2543
        %2552 = vst [vmem:[%s301 + $0x28] sm:$0xff] %v2544
        %2553 = vst [vmem:[%s301 + $0x30] sm:$0xff] %v2545
        %2554 = vst [vmem:[%s301 + $0x38] sm:$0xff] %v2546
        %p2555 = scmp.lt.s32.totalorder %s19, 1
        %s2556 = scalar_select %p2555, %s19, 1
        %s2557 = smul.addr %s2556, 8
        %s2558 = smul.addr %s2557, 8
        %s2559 = scalar_lea.vmem %s6, %s2558
        // Predicated region
        $region57: #{forward.1} parent=43 // pred_check
          %p2560 = pneg %p168
        $region58: #{forward.1} parent=43 // pred_check_branch
          %2562 = sbr.rel (%p2560) target = $region60
        $region59: #{forward.1} parent=43 // pred_region
          _
        $region60: #{forward.1} parent=43 // pred_fallthru
          _
      $region44: #{forward.1} parent=5 // pred_fallthru
        _
      %p2563 = scmp.le.s32.totalorder 2, %s14
      // Predicated region
      $region61: #{forward.1} parent=5 // pred_check
        %p2564 = pneg %p2563
      $region62: #{forward.1} parent=5 // pred_check_branch
        %2566 = sbr.rel (%p2564) target = $region64
      $region63: #{forward.1} parent=5 // pred_region
        %s2567 = ssub.s32 %s14, 2
        // Predicated region
        $region65: #{forward.1} parent=63 // pred_check
          %p2568 = pneg %p174
        $region66: #{forward.1} parent=63 // pred_check_branch
          %2570 = sbr.rel (%p2568) target = $region68
        $region67: #{forward.1} parent=63 // pred_region
          %p2571 = scmp.lt.s32.totalorder %s20, 1
          %s2572 = scalar_select %p2571, %s20, 1
          %s2573 = smul.addr %s2572, 8
          %s2574 = smul.addr %s2573, 8
          %s2575 = scalar_lea.vmem %s6, %s2574
        $region68: #{forward.1} parent=63 // pred_fallthru
          _
      $region64: #{forward.1} parent=5 // pred_fallthru
        _
    $region6: #{forward.1} parent=1 // loop_footer
      %s18 = sadd.s32 1, %s14
    $region7: #{forward.1} parent=1 // loop_footer_branch
      %13 = sbr.rel target = $region3
    $region8: #{forward.1} parent=1 // loop_exit
      _
    %2576 = vsyncpa [#allocation3], 1
    %s2577 = scalar_lea.sflag [#allocation3], 1
    %2578 = vsyncpa %s2577, 1
    %2579 = vsyncpa [#allocation5], 1

</llo_original>
